<compile_context>
chip_gen: v6e
topology: v6e:2x2x1
jax: 0.10.0
libtpu: 0.0.40
codegen_flags: <defaults>
</compile_context>

<pallas_src>
import math

import jax
import jax.numpy as jnp
from jax.experimental import pallas as pl
from jax.experimental.pallas import tpu as pltpu


# ---------------------------------------------------------------------------
# Fused kernel: wavefronted LSTM stack + Linear head + (-exp) mask.
# ---------------------------------------------------------------------------
def _make_fused_kernel(nb_layers, S, B, E, H, Vp):
    G = 4 * H                 # gates per layer  [i | f | g | o]
    Gt = nb_layers * G        # packed gates of all layers
    n_diag = B + nb_layers - 1

    def kernel(xtm_ref, dlog_ref, h0_ref, c0_ref,
               win_ref, bcomb_ref, wrec_ref, wout_ref, bout_ref,
               logits_ref, mask_ref, hlast_ref, clast_ref,
               hseq_ref):
        # Batched input projection + all per-layer biases in ONE matmul.
        # Column block 0 = x @ W_ih0 + b0 ; column block l>0 = b_l (W_in is 0).
        pre = jnp.dot(xtm_ref[...], win_ref[...],
                      preferred_element_type=jnp.float32) + bcomb_ref[...]

        # Single-tanh activation: sigmoid(x) = 0.5*tanh(0.5*x) + 0.5.
        # sc = 1 on tanh ('g') lanes, 0.5 on sigmoid lanes; hoisted out of loop.
        lane = jax.lax.broadcasted_iota(jnp.int32, (S, Gt), 1)
        mod = lane % G
        g_lane = jnp.logical_and(mod >= 2 * H, mod < 3 * H)
        sc = jnp.where(g_lane, jnp.float32(1.0), jnp.float32(0.5))
        off = jnp.where(g_lane, jnp.float32(0.0), jnp.float32(0.5))

        h_cur = [h0_ref[l] for l in range(nb_layers)]   # each (S, H)
        c_cur = [c0_ref[l] for l in range(nb_layers)]

        # Wavefront over diagonals: at diagonal d, layer l advances to time
        # t = d - l (if 0 <= t < B).  The lhs concat is taken BEFORE any
        # update this diagonal, so layer l>0 reads layer l-1's h at time t
        # (produced at diagonal d-1) and its own h at time t-1.
        for d in range(n_diag):
            if nb_layers == 1:
                lhs = h_cur[0]
            else:
                lhs = jnp.concatenate(h_cur, axis=1)     # (S, L*H)
            mm = jnp.dot(lhs, wrec_ref[...],
                         preferred_element_type=jnp.float32)   # (S, L*4H)
            t0 = min(d, B - 1)      # layer-0 columns are discarded when d >= B
            gates = mm + pre[t0 * S:(t0 + 1) * S, :]
            act = jnp.tanh(gates * sc) * sc + off        # one EUP pass

            for l in range(nb_layers):
                t = d - l
                if 0 <= t < B:
                    gl = act[:, l * G:(l + 1) * G]
                    i_g = gl[:, 0 * H:1 * H]
                    f_g = gl[:, 1 * H:2 * H]
                    g_g = gl[:, 2 * H:3 * H]
                    o_g = gl[:, 3 * H:4 * H]
                    c_cur[l] = f_g * c_cur[l] + i_g * g_g
                    h_cur[l] = o_g * jnp.tanh(c_cur[l])
                    if l == nb_layers - 1:
                        # contiguous time-major write of the top layer's h
                        hseq_ref[t * S:(t + 1) * S, :] = h_cur[l]

        for l in range(nb_layers):
            hlast_ref[l] = h_cur[l]
            clast_ref[l] = c_cur[l]

        # Output head on the time-major hidden sequence (B*S, H).
        scores = jnp.dot(hseq_ref[...], wout_ref[...],
                         preferred_element_type=jnp.float32) + bout_ref[...]
        mask = -jnp.exp(scores)                          # (B*S, Vp)
        mask_ref[...] = mask
        logits_ref[...] = dlog_ref[...] + mask           # dlog pre-expanded

    return kernel


def _build_fused_call(nb_layers, S, B, E, H, Vp):
    kernel = _make_fused_kernel(nb_layers, S, B, E, H, Vp)
    vmem = pltpu.MemorySpace.VMEM
    out_shape = (
        jax.ShapeDtypeStruct((B * S, Vp), jnp.float32),         # logits (time-major)
        jax.ShapeDtypeStruct((B * S, Vp), jnp.float32),         # mask   (time-major)
        jax.ShapeDtypeStruct((nb_layers, S, H), jnp.float32),   # final h
        jax.ShapeDtypeStruct((nb_layers, S, H), jnp.float32),   # final c
    )
    return pl.pallas_call(
        kernel,
        out_shape=out_shape,
        in_specs=[pl.BlockSpec(memory_space=vmem) for _ in range(9)],
        out_specs=tuple(pl.BlockSpec(memory_space=vmem) for _ in range(4)),
        scratch_shapes=[pltpu.VMEM((B * S, H), jnp.float32)],   # hidden sequence
    )


# ---------------------------------------------------------------------------
# SyntaxChecker ('learned' mode) wrapper.
# ---------------------------------------------------------------------------
class SyntaxCheckerPallas:
    def __init__(self, check_syntax_mode, lstm_params):
        if check_syntax_mode != 'learned':
            # TODO(synk): 'checker' mode (Lark LALR parser) not translatable.
            raise NotImplementedError("only 'learned' mode implemented")
        self.vocab_size, self.embedding_dim, self.hidden, self.nb_layers = lstm_params
        V, E, H, nL = lstm_params
        self.Vp = ((V + 127) // 128) * 128          # lane-dense padded vocab
        Vp = self.Vp
        G, Gt = 4 * H, nL * 4 * H

        key = jax.random.PRNGKey(0)
        bound = 1.0 / math.sqrt(H)

        def uni(k, shape):
            return jax.random.uniform(k, shape, jnp.float32, -bound, bound)

        # Per-layer weights (kept for the pure-JAX reference), stored
        # transposed relative to PyTorch: (in, 4H), (H, 4H).
        self.w_ih, self.w_hh, self.b = [], [], []
        for layer in range(nL):
            in_sz = E if layer == 0 else H
            key, k1, k2, k3, k4 = jax.random.split(key, 5)
            self.w_ih.append(uni(k1, (in_sz, G)))
            self.w_hh.append(uni(k2, (H, G)))
            self.b.append(uni(k3, (1, G)) + uni(k4, (1, G)))  # b_ih + b_hh
        key, k1, k2 = jax.random.split(key, 3)
        self.w_out = uni(k1, (H, V))
        self.b_out = uni(k2, (1, V))

        # ---- packed kernel weights (3 refs instead of 3*nL tiny DMAs) ----
        # W_in_comb: only layer 0 has a real input projection.
        w_in = jnp.zeros((E, Gt), jnp.float32).at[:, :G].set(self.w_ih[0])
        # b_comb: column block l carries layer l's combined bias.
        b_comb = jnp.concatenate(self.b, axis=1)                    # (1, Gt)
        # W_rec_comb: column block l holds W_hh_l in row block l, and
        # W_ih_l (input = previous layer's h) in row block l-1 for l >= 1.
        w_rec = jnp.zeros((nL * H, Gt), jnp.float32)
        for l in range(nL):
            w_rec = w_rec.at[l * H:(l + 1) * H, l * G:(l + 1) * G].set(self.w_hh[l])
            if l >= 1:
                w_rec = w_rec.at[(l - 1) * H:l * H, l * G:(l + 1) * G].set(self.w_ih[l])
        self.w_in_comb, self.b_comb, self.w_rec_comb = w_in, b_comb, w_rec
        # Zero-padded head -> lane-dense (>=128) output stores.
        self.w_out_pad = jnp.zeros((H, Vp), jnp.float32).at[:, :V].set(self.w_out)
        self.b_out_pad = jnp.zeros((1, Vp), jnp.float32).at[:, :V].set(self.b_out)

        self._call_cache = {}

    def __call__(self, inp, seq_emb, decoder_logit, grammar_state):
        """
        inp          : (BS, max_len)  -- unused in 'learned' mode
        seq_emb      : (S, B, E)
        decoder_logit: (B, V)
        grammar_state: (h0, c0), each (nb_layers, S, H)
                       (batch_first LSTM => its batch dim is S, time dim is B)
        """
        del inp  # unused in 'learned' mode
        h0, c0 = grammar_state
        S, B, E = seq_emb.shape
        V, Vp, H, nL = self.vocab_size, self.Vp, self.hidden, self.nb_layers

        key = (S, B, E, int(decoder_logit.shape[0]))
        if key not in self._call_cache:
            fused = _build_fused_call(nL, S, B, E, H, Vp)

            def fwd(seq_emb, decoder_logit, h0, c0,
                    w_in, b_comb, w_rec, w_out, b_out):
                # One jit: cast, layout, pad, kernel, un-layout, slice.
                x_tm = jnp.transpose(seq_emb.astype(jnp.float32),
                                     (1, 0, 2)).reshape(B * S, E)
                dlog = jnp.pad(decoder_logit.astype(jnp.float32),
                               ((0, 0), (0, Vp - V)))
                dlog_tm = jnp.repeat(dlog, S, axis=0)              # (B*S, Vp)
                lg, mk, hl, cl = fused(x_tm, dlog_tm,
                                       h0.astype(jnp.float32),
                                       c0.astype(jnp.float32),
                                       w_in, b_comb, w_rec, w_out, b_out)
                # back to the module's (S, B, V) layout (single tiny transpose)
                lg = jnp.transpose(lg.reshape(B, S, Vp), (1, 0, 2))[..., :V]
                mk = jnp.transpose(mk.reshape(B, S, Vp), (1, 0, 2))[..., :V]
                return lg, mk, hl, cl

            self._call_cache[key] = jax.jit(fwd)

        fwd = self._call_cache[key]
        logits, syntax_mask, h_last, c_last = fwd(
            seq_emb, decoder_logit, h0, c0,
            self.w_in_comb, self.b_comb, self.w_rec_comb,
            self.w_out_pad, self.b_out_pad)
        return logits, (h_last, c_last), syntax_mask


# ---------------------------------------------------------------------------
# Pure-JAX reference for a sanity check.
# ---------------------------------------------------------------------------
def _ref_forward(model, seq_emb, decoder_logit, h0, c0):
    H = model.hidden
    x = jnp.transpose(seq_emb, (1, 0, 2))  # time-major (B, S, E)
    h_fin, c_fin = [], []
    for layer in range(model.nb_layers):
        w_ih, w_hh, b = model.w_ih[layer], model.w_hh[layer], model.b[layer]

        def step(carry, x_t):
            h, c = carry
            g = x_t @ w_ih + h @ w_hh + b
            i = jax.nn.sigmoid(g[:, 0 * H:1 * H])
            f = jax.nn.sigmoid(g[:, 1 * H:2 * H])
            gg = jnp.tanh(g[:, 2 * H:3 * H])
            o = jax.nn.sigmoid(g[:, 3 * H:4 * H])
            c = f * c + i * gg
            h = o * jnp.tanh(c)
            return (h, c), h

        (hf, cf), hs = jax.lax.scan(step, (h0[layer], c0[layer]), x)
        x = hs
        h_fin.append(hf)
        c_fin.append(cf)
    stx_out = jnp.transpose(x, (1, 0, 2))               # (S, B, H)
    scores = stx_out @ model.w_out + model.b_out
    mask = -jnp.exp(scores)
    return (decoder_logit[None, :, :] + mask, mask,
            jnp.stack(h_fin, 0), jnp.stack(c_fin, 0))


if __name__ == "__main__":
    V, E, H, NL = 16, 32, 32, 2     # vocab, embedding, hidden, layers
    S, B = 4, 8                     # seq_emb: (S, B, E); decoder batch = B

    model = SyntaxCheckerPallas('learned', (V, E, H, NL))

    key = jax.random.PRNGKey(0)
    k1, k2, k3, k4 = jax.random.split(key, 4)
    seq_emb = jax.random.normal(k1, (S, B, E), jnp.float32)
    decoder_logit = jax.random.normal(k2, (B, V), jnp.float32)
    h0 = 0.1 * jax.random.normal(k3, (NL, S, H), jnp.float32)
    c0 = 0.1 * jax.random.normal(k4, (NL, S, H), jnp.float32)
    inp = jnp.zeros((B, 8), jnp.int32)   # unused in 'learned' mode

    logits, state, syntax_mask = model(inp, seq_emb, decoder_logit, (h0, c0))
    jax.block_until_ready((logits, state, syntax_mask))

    ref_logits, ref_mask, ref_h, ref_c = _ref_forward(
        model, seq_emb, decoder_logit, h0, c0)
    assert logits.shape == (S, B, V) and syntax_mask.shape == (S, B, V)
    assert jnp.allclose(logits, ref_logits, rtol=2e-2, atol=2e-2)
    assert jnp.allclose(syntax_mask, ref_mask, rtol=2e-2, atol=2e-2)
    assert jnp.allclose(state[0], ref_h, rtol=2e-2, atol=2e-2)
    assert jnp.allclose(state[1], ref_c, rtol=2e-2, atol=2e-2)

    print("KERNEL_OK")
</pallas_src>

<mosaic_0001>
module attributes {stable_mosaic.version = 11 : i64} {
  func.func @kernel(%arg0: memref<32x32xf32, #tpu.memory_space<vmem>>, %arg1: memref<32x128xf32, #tpu.memory_space<vmem>>, %arg2: memref<2x4x32xf32, #tpu.memory_space<vmem>>, %arg3: memref<2x4x32xf32, #tpu.memory_space<vmem>>, %arg4: memref<32x256xf32, #tpu.memory_space<vmem>>, %arg5: memref<1x256xf32, #tpu.memory_space<vmem>>, %arg6: memref<64x256xf32, #tpu.memory_space<vmem>>, %arg7: memref<32x128xf32, #tpu.memory_space<vmem>>, %arg8: memref<1x128xf32, #tpu.memory_space<vmem>>, %arg9: memref<32x128xf32, #tpu.memory_space<vmem>>, %arg10: memref<32x128xf32, #tpu.memory_space<vmem>>, %arg11: memref<2x4x32xf32, #tpu.memory_space<vmem>>, %arg12: memref<2x4x32xf32, #tpu.memory_space<vmem>>, %arg13: memref<32x32xf32, #tpu.memory_space<vmem>>) attributes {dimension_semantics = [], scalar_prefetch = 0 : i64, scratch_operands = 1 : i64, tpu.core_type = #tpu.core_type<tc>} {
    %c0 = arith.constant 0 : index
    %c0_0 = arith.constant 0 : index
    %0 = vector.load %arg0[%c0, %c0_0] : memref<32x32xf32, #tpu.memory_space<vmem>>, vector<32x32xf32>
    %c0_1 = arith.constant 0 : index
    %c0_2 = arith.constant 0 : index
    %1 = vector.load %arg4[%c0_1, %c0_2] : memref<32x256xf32, #tpu.memory_space<vmem>>, vector<32x256xf32>
    %cst = arith.constant dense<0.000000e+00> : vector<32x256xf32>
    %2 = tpu.matmul %0, %1, %cst {dimension_numbers = #tpu.dot_dimension_numbers<[1], [0], [0], [1], [0, 0, 1, 1], [], []>} : vector<32x32xf32>, vector<32x256xf32>, vector<32x256xf32> -> vector<32x256xf32>
    %c0_3 = arith.constant 0 : index
    %c0_4 = arith.constant 0 : index
    %3 = vector.load %arg5[%c0_3, %c0_4] : memref<1x256xf32, #tpu.memory_space<vmem>>, vector<1x256xf32>
    %4 = vector.broadcast %3 : vector<1x256xf32> to vector<32x256xf32>
    %5 = arith.addf %2, %4 : vector<32x256xf32>
    %6 = tpu.iota {dimensions = array<i32: 1>} : vector<4x256xi32>
    %c128_i32 = arith.constant 128 : i32
    %c0_i32 = arith.constant 0 : i32
    %7 = arith.cmpi eq, %c128_i32, %c0_i32 : i32
    %c1_i32 = arith.constant 1 : i32
    %8 = arith.select %7, %c1_i32, %c128_i32 : i32
    %9 = vector.broadcast %8 : i32 to vector<4x256xi32>
    %10 = arith.remsi %6, %9 : vector<4x256xi32>
    %c0_i32_5 = arith.constant 0 : i32
    %11 = vector.broadcast %c0_i32_5 : i32 to vector<4x256xi32>
    %12 = arith.cmpi ne, %10, %11 : vector<4x256xi32>
    %c0_i32_6 = arith.constant 0 : i32
    %13 = vector.broadcast %c0_i32_6 : i32 to vector<4x256xi32>
    %14 = arith.cmpi slt, %10, %13 : vector<4x256xi32>
    %c0_i32_7 = arith.constant 0 : i32
    %15 = arith.cmpi slt, %8, %c0_i32_7 : i32
    %16 = vector.broadcast %15 : i1 to vector<4x256xi1>
    %17 = vector.broadcast %16 : vector<4x256xi1> to vector<4x256xi1>
    %18 = arith.xori %14, %17 : vector<4x256xi1>
    %19 = arith.andi %18, %12 : vector<4x256xi1>
    %20 = vector.broadcast %8 : i32 to vector<4x256xi32>
    %21 = arith.addi %10, %20 : vector<4x256xi32>
    %22 = arith.select %19, %21, %10 : vector<4x256xi1>, vector<4x256xi32>
    %c64_i32 = arith.constant 64 : i32
    %23 = vector.broadcast %c64_i32 : i32 to vector<4x256xi32>
    %24 = arith.cmpi sge, %22, %23 : vector<4x256xi32>
    %c96_i32 = arith.constant 96 : i32
    %25 = vector.broadcast %c96_i32 : i32 to vector<4x256xi32>
    %26 = arith.cmpi slt, %22, %25 : vector<4x256xi32>
    %27 = arith.andi %24, %26 : vector<4x256xi1>
    %cst_8 = arith.constant 1.000000e+00 : f32
    %cst_9 = arith.constant 5.000000e-01 : f32
    %28 = vector.broadcast %cst_8 : f32 to vector<4x256xf32>
    %29 = vector.broadcast %cst_9 : f32 to vector<4x256xf32>
    %30 = arith.select %27, %28, %29 : vector<4x256xi1>, vector<4x256xf32>
    %cst_10 = arith.constant 0.000000e+00 : f32
    %cst_11 = arith.constant 5.000000e-01 : f32
    %31 = vector.broadcast %cst_10 : f32 to vector<4x256xf32>
    %32 = vector.broadcast %cst_11 : f32 to vector<4x256xf32>
    %33 = arith.select %27, %31, %32 : vector<4x256xi1>, vector<4x256xf32>
    %c0_12 = arith.constant 0 : index
    %c0_13 = arith.constant 0 : index
    %c0_14 = arith.constant 0 : index
    %34 = vector.load %arg2[%c0_12, %c0_13, %c0_14] : memref<2x4x32xf32, #tpu.memory_space<vmem>>, vector<1x4x32xf32>
    %35 = vector.shape_cast %34 : vector<1x4x32xf32> to vector<4x32xf32>
    %c1 = arith.constant 1 : index
    %c0_15 = arith.constant 0 : index
    %c0_16 = arith.constant 0 : index
    %36 = vector.load %arg2[%c1, %c0_15, %c0_16] : memref<2x4x32xf32, #tpu.memory_space<vmem>>, vector<1x4x32xf32>
    %37 = vector.shape_cast %36 : vector<1x4x32xf32> to vector<4x32xf32>
    %c0_17 = arith.constant 0 : index
    %c0_18 = arith.constant 0 : index
    %c0_19 = arith.constant 0 : index
    %38 = vector.load %arg3[%c0_17, %c0_18, %c0_19] : memref<2x4x32xf32, #tpu.memory_space<vmem>>, vector<1x4x32xf32>
    %39 = vector.shape_cast %38 : vector<1x4x32xf32> to vector<4x32xf32>
    %c1_20 = arith.constant 1 : index
    %c0_21 = arith.constant 0 : index
    %c0_22 = arith.constant 0 : index
    %40 = vector.load %arg3[%c1_20, %c0_21, %c0_22] : memref<2x4x32xf32, #tpu.memory_space<vmem>>, vector<1x4x32xf32>
    %41 = vector.shape_cast %40 : vector<1x4x32xf32> to vector<4x32xf32>
    %42 = tpu.concatenate %35, %37 in 1 : vector<4x32xf32>, vector<4x32xf32> -> vector<4x64xf32>
    %c0_23 = arith.constant 0 : index
    %c0_24 = arith.constant 0 : index
    %43 = vector.load %arg6[%c0_23, %c0_24] : memref<64x256xf32, #tpu.memory_space<vmem>>, vector<64x256xf32>
    %cst_25 = arith.constant dense<0.000000e+00> : vector<4x256xf32>
    %44 = tpu.matmul %42, %43, %cst_25 {dimension_numbers = #tpu.dot_dimension_numbers<[1], [0], [0], [1], [0, 0, 1, 1], [], []>} : vector<4x64xf32>, vector<64x256xf32>, vector<4x256xf32> -> vector<4x256xf32>
    %45 = vector.extract_strided_slice %5 {offsets = [0, 0], sizes = [4, 256], strides = [1, 1]} : vector<32x256xf32> to vector<4x256xf32>
    %46 = arith.addf %44, %45 : vector<4x256xf32>
    %47 = arith.mulf %46, %30 : vector<4x256xf32>
    %48 = math.tanh %47 : vector<4x256xf32>
    %49 = arith.mulf %48, %30 : vector<4x256xf32>
    %50 = arith.addf %49, %33 : vector<4x256xf32>
    %51 = vector.extract_strided_slice %50 {offsets = [0, 0], sizes = [4, 128], strides = [1, 1]} : vector<4x256xf32> to vector<4x128xf32>
    %52 = vector.extract_strided_slice %51 {offsets = [0, 0], sizes = [4, 32], strides = [1, 1]} : vector<4x128xf32> to vector<4x32xf32>
    %53 = vector.extract_strided_slice %51 {offsets = [0, 32], sizes = [4, 32], strides = [1, 1]} : vector<4x128xf32> to vector<4x32xf32>
    %54 = vector.extract_strided_slice %51 {offsets = [0, 64], sizes = [4, 32], strides = [1, 1]} : vector<4x128xf32> to vector<4x32xf32>
    %55 = vector.extract_strided_slice %51 {offsets = [0, 96], sizes = [4, 32], strides = [1, 1]} : vector<4x128xf32> to vector<4x32xf32>
    %56 = arith.mulf %53, %39 : vector<4x32xf32>
    %57 = arith.mulf %52, %54 : vector<4x32xf32>
    %58 = arith.addf %56, %57 : vector<4x32xf32>
    %59 = math.tanh %58 : vector<4x32xf32>
    %60 = arith.mulf %55, %59 : vector<4x32xf32>
    %61 = tpu.concatenate %60, %37 in 1 : vector<4x32xf32>, vector<4x32xf32> -> vector<4x64xf32>
    %c0_26 = arith.constant 0 : index
    %c0_27 = arith.constant 0 : index
    %62 = vector.load %arg6[%c0_26, %c0_27] : memref<64x256xf32, #tpu.memory_space<vmem>>, vector<64x256xf32>
    %cst_28 = arith.constant dense<0.000000e+00> : vector<4x256xf32>
    %63 = tpu.matmul %61, %62, %cst_28 {dimension_numbers = #tpu.dot_dimension_numbers<[1], [0], [0], [1], [0, 0, 1, 1], [], []>} : vector<4x64xf32>, vector<64x256xf32>, vector<4x256xf32> -> vector<4x256xf32>
    %64 = vector.extract_strided_slice %5 {offsets = [4, 0], sizes = [4, 256], strides = [1, 1]} : vector<32x256xf32> to vector<4x256xf32>
    %65 = arith.addf %63, %64 : vector<4x256xf32>
    %66 = arith.mulf %65, %30 : vector<4x256xf32>
    %67 = math.tanh %66 : vector<4x256xf32>
    %68 = arith.mulf %67, %30 : vector<4x256xf32>
    %69 = arith.addf %68, %33 : vector<4x256xf32>
    %70 = vector.extract_strided_slice %69 {offsets = [0, 0], sizes = [4, 128], strides = [1, 1]} : vector<4x256xf32> to vector<4x128xf32>
    %71 = vector.extract_strided_slice %70 {offsets = [0, 0], sizes = [4, 32], strides = [1, 1]} : vector<4x128xf32> to vector<4x32xf32>
    %72 = vector.extract_strided_slice %70 {offsets = [0, 32], sizes = [4, 32], strides = [1, 1]} : vector<4x128xf32> to vector<4x32xf32>
    %73 = vector.extract_strided_slice %70 {offsets = [0, 64], sizes = [4, 32], strides = [1, 1]} : vector<4x128xf32> to vector<4x32xf32>
    %74 = vector.extract_strided_slice %70 {offsets = [0, 96], sizes = [4, 32], strides = [1, 1]} : vector<4x128xf32> to vector<4x32xf32>
    %75 = arith.mulf %72, %58 : vector<4x32xf32>
    %76 = arith.mulf %71, %73 : vector<4x32xf32>
    %77 = arith.addf %75, %76 : vector<4x32xf32>
    %78 = math.tanh %77 : vector<4x32xf32>
    %79 = arith.mulf %74, %78 : vector<4x32xf32>
    %80 = vector.extract_strided_slice %69 {offsets = [0, 128], sizes = [4, 128], strides = [1, 1]} : vector<4x256xf32> to vector<4x128xf32>
    %81 = vector.extract_strided_slice %80 {offsets = [0, 0], sizes = [4, 32], strides = [1, 1]} : vector<4x128xf32> to vector<4x32xf32>
    %82 = vector.extract_strided_slice %80 {offsets = [0, 32], sizes = [4, 32], strides = [1, 1]} : vector<4x128xf32> to vector<4x32xf32>
    %83 = vector.extract_strided_slice %80 {offsets = [0, 64], sizes = [4, 32], strides = [1, 1]} : vector<4x128xf32> to vector<4x32xf32>
    %84 = vector.extract_strided_slice %80 {offsets = [0, 96], sizes = [4, 32], strides = [1, 1]} : vector<4x128xf32> to vector<4x32xf32>
    %85 = arith.mulf %82, %41 : vector<4x32xf32>
    %86 = arith.mulf %81, %83 : vector<4x32xf32>
    %87 = arith.addf %85, %86 : vector<4x32xf32>
    %88 = math.tanh %87 : vector<4x32xf32>
    %89 = arith.mulf %84, %88 : vector<4x32xf32>
    %c0_29 = arith.constant 0 : index
    %c0_30 = arith.constant 0 : index
    %90 = vector.load %arg13[%c0_29, %c0_30] : memref<32x32xf32, #tpu.memory_space<vmem>>, vector<4x32xf32>
    tpu.vector_store %arg13[%c0_29, %c0_30], %89 {strides = array<i32>} : memref<32x32xf32, #tpu.memory_space<vmem>>, vector<4x32xf32>,
    %91 = tpu.concatenate %79, %89 in 1 : vector<4x32xf32>, vector<4x32xf32> -> vector<4x64xf32>
    %c0_31 = arith.constant 0 : index
    %c0_32 = arith.constant 0 : index
    %92 = vector.load %arg6[%c0_31, %c0_32] : memref<64x256xf32, #tpu.memory_space<vmem>>, vector<64x256xf32>
    %cst_33 = arith.constant dense<0.000000e+00> : vector<4x256xf32>
    %93 = tpu.matmul %91, %92, %cst_33 {dimension_numbers = #tpu.dot_dimension_numbers<[1], [0], [0], [1], [0, 0, 1, 1], [], []>} : vector<4x64xf32>, vector<64x256xf32>, vector<4x256xf32> -> vector<4x256xf32>
    %94 = vector.extract_strided_slice %5 {offsets = [8, 0], sizes = [4, 256], strides = [1, 1]} : vector<32x256xf32> to vector<4x256xf32>
    %95 = arith.addf %93, %94 : vector<4x256xf32>
    %96 = arith.mulf %95, %30 : vector<4x256xf32>
    %97 = math.tanh %96 : vector<4x256xf32>
    %98 = arith.mulf %97, %30 : vector<4x256xf32>
    %99 = arith.addf %98, %33 : vector<4x256xf32>
    %100 = vector.extract_strided_slice %99 {offsets = [0, 0], sizes = [4, 128], strides = [1, 1]} : vector<4x256xf32> to vector<4x128xf32>
    %101 = vector.extract_strided_slice %100 {offsets = [0, 0], sizes = [4, 32], strides = [1, 1]} : vector<4x128xf32> to vector<4x32xf32>
    %102 = vector.extract_strided_slice %100 {offsets = [0, 32], sizes = [4, 32], strides = [1, 1]} : vector<4x128xf32> to vector<4x32xf32>
    %103 = vector.extract_strided_slice %100 {offsets = [0, 64], sizes = [4, 32], strides = [1, 1]} : vector<4x128xf32> to vector<4x32xf32>
    %104 = vector.extract_strided_slice %100 {offsets = [0, 96], sizes = [4, 32], strides = [1, 1]} : vector<4x128xf32> to vector<4x32xf32>
    %105 = arith.mulf %102, %77 : vector<4x32xf32>
    %106 = arith.mulf %101, %103 : vector<4x32xf32>
    %107 = arith.addf %105, %106 : vector<4x32xf32>
    %108 = math.tanh %107 : vector<4x32xf32>
    %109 = arith.mulf %104, %108 : vector<4x32xf32>
    %110 = vector.extract_strided_slice %99 {offsets = [0, 128], sizes = [4, 128], strides = [1, 1]} : vector<4x256xf32> to vector<4x128xf32>
    %111 = vector.extract_strided_slice %110 {offsets = [0, 0], sizes = [4, 32], strides = [1, 1]} : vector<4x128xf32> to vector<4x32xf32>
    %112 = vector.extract_strided_slice %110 {offsets = [0, 32], sizes = [4, 32], strides = [1, 1]} : vector<4x128xf32> to vector<4x32xf32>
    %113 = vector.extract_strided_slice %110 {offsets = [0, 64], sizes = [4, 32], strides = [1, 1]} : vector<4x128xf32> to vector<4x32xf32>
    %114 = vector.extract_strided_slice %110 {offsets = [0, 96], sizes = [4, 32], strides = [1, 1]} : vector<4x128xf32> to vector<4x32xf32>
    %115 = arith.mulf %112, %87 : vector<4x32xf32>
    %116 = arith.mulf %111, %113 : vector<4x32xf32>
    %117 = arith.addf %115, %116 : vector<4x32xf32>
    %118 = math.tanh %117 : vector<4x32xf32>
    %119 = arith.mulf %114, %118 : vector<4x32xf32>
    %c4 = arith.constant 4 : index
    %c0_34 = arith.constant 0 : index
    %120 = vector.load %arg13[%c4, %c0_34] : memref<32x32xf32, #tpu.memory_space<vmem>>, vector<4x32xf32>
    tpu.vector_store %arg13[%c4, %c0_34], %119 {strides = array<i32>} : memref<32x32xf32, #tpu.memory_space<vmem>>, vector<4x32xf32>,
    %121 = tpu.concatenate %109, %119 in 1 : vector<4x32xf32>, vector<4x32xf32> -> vector<4x64xf32>
    %c0_35 = arith.constant 0 : index
    %c0_36 = arith.constant 0 : index
    %122 = vector.load %arg6[%c0_35, %c0_36] : memref<64x256xf32, #tpu.memory_space<vmem>>, vector<64x256xf32>
    %cst_37 = arith.constant dense<0.000000e+00> : vector<4x256xf32>
    %123 = tpu.matmul %121, %122, %cst_37 {dimension_numbers = #tpu.dot_dimension_numbers<[1], [0], [0], [1], [0, 0, 1, 1], [], []>} : vector<4x64xf32>, vector<64x256xf32>, vector<4x256xf32> -> vector<4x256xf32>
    %124 = vector.extract_strided_slice %5 {offsets = [12, 0], sizes = [4, 256], strides = [1, 1]} : vector<32x256xf32> to vector<4x256xf32>
    %125 = arith.addf %123, %124 : vector<4x256xf32>
    %126 = arith.mulf %125, %30 : vector<4x256xf32>
    %127 = math.tanh %126 : vector<4x256xf32>
    %128 = arith.mulf %127, %30 : vector<4x256xf32>
    %129 = arith.addf %128, %33 : vector<4x256xf32>
    %130 = vector.extract_strided_slice %129 {offsets = [0, 0], sizes = [4, 128], strides = [1, 1]} : vector<4x256xf32> to vector<4x128xf32>
    %131 = vector.extract_strided_slice %130 {offsets = [0, 0], sizes = [4, 32], strides = [1, 1]} : vector<4x128xf32> to vector<4x32xf32>
    %132 = vector.extract_strided_slice %130 {offsets = [0, 32], sizes = [4, 32], strides = [1, 1]} : vector<4x128xf32> to vector<4x32xf32>
    %133 = vector.extract_strided_slice %130 {offsets = [0, 64], sizes = [4, 32], strides = [1, 1]} : vector<4x128xf32> to vector<4x32xf32>
    %134 = vector.extract_strided_slice %130 {offsets = [0, 96], sizes = [4, 32], strides = [1, 1]} : vector<4x128xf32> to vector<4x32xf32>
    %135 = arith.mulf %132, %107 : vector<4x32xf32>
    %136 = arith.mulf %131, %133 : vector<4x32xf32>
    %137 = arith.addf %135, %136 : vector<4x32xf32>
    %138 = math.tanh %137 : vector<4x32xf32>
    %139 = arith.mulf %134, %138 : vector<4x32xf32>
    %140 = vector.extract_strided_slice %129 {offsets = [0, 128], sizes = [4, 128], strides = [1, 1]} : vector<4x256xf32> to vector<4x128xf32>
    %141 = vector.extract_strided_slice %140 {offsets = [0, 0], sizes = [4, 32], strides = [1, 1]} : vector<4x128xf32> to vector<4x32xf32>
    %142 = vector.extract_strided_slice %140 {offsets = [0, 32], sizes = [4, 32], strides = [1, 1]} : vector<4x128xf32> to vector<4x32xf32>
    %143 = vector.extract_strided_slice %140 {offsets = [0, 64], sizes = [4, 32], strides = [1, 1]} : vector<4x128xf32> to vector<4x32xf32>
    %144 = vector.extract_strided_slice %140 {offsets = [0, 96], sizes = [4, 32], strides = [1, 1]} : vector<4x128xf32> to vector<4x32xf32>
    %145 = arith.mulf %142, %117 : vector<4x32xf32>
    %146 = arith.mulf %141, %143 : vector<4x32xf32>
    %147 = arith.addf %145, %146 : vector<4x32xf32>
    %148 = math.tanh %147 : vector<4x32xf32>
    %149 = arith.mulf %144, %148 : vector<4x32xf32>
    %c8 = arith.constant 8 : index
    %c0_38 = arith.constant 0 : index
    %150 = vector.load %arg13[%c8, %c0_38] : memref<32x32xf32, #tpu.memory_space<vmem>>, vector<4x32xf32>
    tpu.vector_store %arg13[%c8, %c0_38], %149 {strides = array<i32>} : memref<32x32xf32, #tpu.memory_space<vmem>>, vector<4x32xf32>,
    %151 = tpu.concatenate %139, %149 in 1 : vector<4x32xf32>, vector<4x32xf32> -> vector<4x64xf32>
    %c0_39 = arith.constant 0 : index
    %c0_40 = arith.constant 0 : index
    %152 = vector.load %arg6[%c0_39, %c0_40] : memref<64x256xf32, #tpu.memory_space<vmem>>, vector<64x256xf32>
    %cst_41 = arith.constant dense<0.000000e+00> : vector<4x256xf32>
    %153 = tpu.matmul %151, %152, %cst_41 {dimension_numbers = #tpu.dot_dimension_numbers<[1], [0], [0], [1], [0, 0, 1, 1], [], []>} : vector<4x64xf32>, vector<64x256xf32>, vector<4x256xf32> -> vector<4x256xf32>
    %154 = vector.extract_strided_slice %5 {offsets = [16, 0], sizes = [4, 256], strides = [1, 1]} : vector<32x256xf32> to vector<4x256xf32>
    %155 = arith.addf %153, %154 : vector<4x256xf32>
    %156 = arith.mulf %155, %30 : vector<4x256xf32>
    %157 = math.tanh %156 : vector<4x256xf32>
    %158 = arith.mulf %157, %30 : vector<4x256xf32>
    %159 = arith.addf %158, %33 : vector<4x256xf32>
    %160 = vector.extract_strided_slice %159 {offsets = [0, 0], sizes = [4, 128], strides = [1, 1]} : vector<4x256xf32> to vector<4x128xf32>
    %161 = vector.extract_strided_slice %160 {offsets = [0, 0], sizes = [4, 32], strides = [1, 1]} : vector<4x128xf32> to vector<4x32xf32>
    %162 = vector.extract_strided_slice %160 {offsets = [0, 32], sizes = [4, 32], strides = [1, 1]} : vector<4x128xf32> to vector<4x32xf32>
    %163 = vector.extract_strided_slice %160 {offsets = [0, 64], sizes = [4, 32], strides = [1, 1]} : vector<4x128xf32> to vector<4x32xf32>
    %164 = vector.extract_strided_slice %160 {offsets = [0, 96], sizes = [4, 32], strides = [1, 1]} : vector<4x128xf32> to vector<4x32xf32>
    %165 = arith.mulf %162, %137 : vector<4x32xf32>
    %166 = arith.mulf %161, %163 : vector<4x32xf32>
    %167 = arith.addf %165, %166 : vector<4x32xf32>
    %168 = math.tanh %167 : vector<4x32xf32>
    %169 = arith.mulf %164, %168 : vector<4x32xf32>
    %170 = vector.extract_strided_slice %159 {offsets = [0, 128], sizes = [4, 128], strides = [1, 1]} : vector<4x256xf32> to vector<4x128xf32>
    %171 = vector.extract_strided_slice %170 {offsets = [0, 0], sizes = [4, 32], strides = [1, 1]} : vector<4x128xf32> to vector<4x32xf32>
    %172 = vector.extract_strided_slice %170 {offsets = [0, 32], sizes = [4, 32], strides = [1, 1]} : vector<4x128xf32> to vector<4x32xf32>
    %173 = vector.extract_strided_slice %170 {offsets = [0, 64], sizes = [4, 32], strides = [1, 1]} : vector<4x128xf32> to vector<4x32xf32>
    %174 = vector.extract_strided_slice %170 {offsets = [0, 96], sizes = [4, 32], strides = [1, 1]} : vector<4x128xf32> to vector<4x32xf32>
    %175 = arith.mulf %172, %147 : vector<4x32xf32>
    %176 = arith.mulf %171, %173 : vector<4x32xf32>
    %177 = arith.addf %175, %176 : vector<4x32xf32>
    %178 = math.tanh %177 : vector<4x32xf32>
    %179 = arith.mulf %174, %178 : vector<4x32xf32>
    %c12 = arith.constant 12 : index
    %c0_42 = arith.constant 0 : index
    %180 = vector.load %arg13[%c12, %c0_42] : memref<32x32xf32, #tpu.memory_space<vmem>>, vector<4x32xf32>
    tpu.vector_store %arg13[%c12, %c0_42], %179 {strides = array<i32>} : memref<32x32xf32, #tpu.memory_space<vmem>>, vector<4x32xf32>,
    %181 = tpu.concatenate %169, %179 in 1 : vector<4x32xf32>, vector<4x32xf32> -> vector<4x64xf32>
    %c0_43 = arith.constant 0 : index
    %c0_44 = arith.constant 0 : index
    %182 = vector.load %arg6[%c0_43, %c0_44] : memref<64x256xf32, #tpu.memory_space<vmem>>, vector<64x256xf32>
    %cst_45 = arith.constant dense<0.000000e+00> : vector<4x256xf32>
    %183 = tpu.matmul %181, %182, %cst_45 {dimension_numbers = #tpu.dot_dimension_numbers<[1], [0], [0], [1], [0, 0, 1, 1], [], []>} : vector<4x64xf32>, vector<64x256xf32>, vector<4x256xf32> -> vector<4x256xf32>
    %184 = vector.extract_strided_slice %5 {offsets = [20, 0], sizes = [4, 256], strides = [1, 1]} : vector<32x256xf32> to vector<4x256xf32>
    %185 = arith.addf %183, %184 : vector<4x256xf32>
    %186 = arith.mulf %185, %30 : vector<4x256xf32>
    %187 = math.tanh %186 : vector<4x256xf32>
    %188 = arith.mulf %187, %30 : vector<4x256xf32>
    %189 = arith.addf %188, %33 : vector<4x256xf32>
    %190 = vector.extract_strided_slice %189 {offsets = [0, 0], sizes = [4, 128], strides = [1, 1]} : vector<4x256xf32> to vector<4x128xf32>
    %191 = vector.extract_strided_slice %190 {offsets = [0, 0], sizes = [4, 32], strides = [1, 1]} : vector<4x128xf32> to vector<4x32xf32>
    %192 = vector.extract_strided_slice %190 {offsets = [0, 32], sizes = [4, 32], strides = [1, 1]} : vector<4x128xf32> to vector<4x32xf32>
    %193 = vector.extract_strided_slice %190 {offsets = [0, 64], sizes = [4, 32], strides = [1, 1]} : vector<4x128xf32> to vector<4x32xf32>
    %194 = vector.extract_strided_slice %190 {offsets = [0, 96], sizes = [4, 32], strides = [1, 1]} : vector<4x128xf32> to vector<4x32xf32>
    %195 = arith.mulf %192, %167 : vector<4x32xf32>
    %196 = arith.mulf %191, %193 : vector<4x32xf32>
    %197 = arith.addf %195, %196 : vector<4x32xf32>
    %198 = math.tanh %197 : vector<4x32xf32>
    %199 = arith.mulf %194, %198 : vector<4x32xf32>
    %200 = vector.extract_strided_slice %189 {offsets = [0, 128], sizes = [4, 128], strides = [1, 1]} : vector<4x256xf32> to vector<4x128xf32>
    %201 = vector.extract_strided_slice %200 {offsets = [0, 0], sizes = [4, 32], strides = [1, 1]} : vector<4x128xf32> to vector<4x32xf32>
    %202 = vector.extract_strided_slice %200 {offsets = [0, 32], sizes = [4, 32], strides = [1, 1]} : vector<4x128xf32> to vector<4x32xf32>
    %203 = vector.extract_strided_slice %200 {offsets = [0, 64], sizes = [4, 32], strides = [1, 1]} : vector<4x128xf32> to vector<4x32xf32>
    %204 = vector.extract_strided_slice %200 {offsets = [0, 96], sizes = [4, 32], strides = [1, 1]} : vector<4x128xf32> to vector<4x32xf32>
    %205 = arith.mulf %202, %177 : vector<4x32xf32>
    %206 = arith.mulf %201, %203 : vector<4x32xf32>
    %207 = arith.addf %205, %206 : vector<4x32xf32>
    %208 = math.tanh %207 : vector<4x32xf32>
    %209 = arith.mulf %204, %208 : vector<4x32xf32>
    %c16 = arith.constant 16 : index
    %c0_46 = arith.constant 0 : index
    %210 = vector.load %arg13[%c16, %c0_46] : memref<32x32xf32, #tpu.memory_space<vmem>>, vector<4x32xf32>
    tpu.vector_store %arg13[%c16, %c0_46], %209 {strides = array<i32>} : memref<32x32xf32, #tpu.memory_space<vmem>>, vector<4x32xf32>,
    %211 = tpu.concatenate %199, %209 in 1 : vector<4x32xf32>, vector<4x32xf32> -> vector<4x64xf32>
    %c0_47 = arith.constant 0 : index
    %c0_48 = arith.constant 0 : index
    %212 = vector.load %arg6[%c0_47, %c0_48] : memref<64x256xf32, #tpu.memory_space<vmem>>, vector<64x256xf32>
    %cst_49 = arith.constant dense<0.000000e+00> : vector<4x256xf32>
    %213 = tpu.matmul %211, %212, %cst_49 {dimension_numbers = #tpu.dot_dimension_numbers<[1], [0], [0], [1], [0, 0, 1, 1], [], []>} : vector<4x64xf32>, vector<64x256xf32>, vector<4x256xf32> -> vector<4x256xf32>
    %214 = vector.extract_strided_slice %5 {offsets = [24, 0], sizes = [4, 256], strides = [1, 1]} : vector<32x256xf32> to vector<4x256xf32>
    %215 = arith.addf %213, %214 : vector<4x256xf32>
    %216 = arith.mulf %215, %30 : vector<4x256xf32>
    %217 = math.tanh %216 : vector<4x256xf32>
    %218 = arith.mulf %217, %30 : vector<4x256xf32>
    %219 = arith.addf %218, %33 : vector<4x256xf32>
    %220 = vector.extract_strided_slice %219 {offsets = [0, 0], sizes = [4, 128], strides = [1, 1]} : vector<4x256xf32> to vector<4x128xf32>
    %221 = vector.extract_strided_slice %220 {offsets = [0, 0], sizes = [4, 32], strides = [1, 1]} : vector<4x128xf32> to vector<4x32xf32>
    %222 = vector.extract_strided_slice %220 {offsets = [0, 32], sizes = [4, 32], strides = [1, 1]} : vector<4x128xf32> to vector<4x32xf32>
    %223 = vector.extract_strided_slice %220 {offsets = [0, 64], sizes = [4, 32], strides = [1, 1]} : vector<4x128xf32> to vector<4x32xf32>
    %224 = vector.extract_strided_slice %220 {offsets = [0, 96], sizes = [4, 32], strides = [1, 1]} : vector<4x128xf32> to vector<4x32xf32>
    %225 = arith.mulf %222, %197 : vector<4x32xf32>
    %226 = arith.mulf %221, %223 : vector<4x32xf32>
    %227 = arith.addf %225, %226 : vector<4x32xf32>
    %228 = math.tanh %227 : vector<4x32xf32>
    %229 = arith.mulf %224, %228 : vector<4x32xf32>
    %230 = vector.extract_strided_slice %219 {offsets = [0, 128], sizes = [4, 128], strides = [1, 1]} : vector<4x256xf32> to vector<4x128xf32>
    %231 = vector.extract_strided_slice %230 {offsets = [0, 0], sizes = [4, 32], strides = [1, 1]} : vector<4x128xf32> to vector<4x32xf32>
    %232 = vector.extract_strided_slice %230 {offsets = [0, 32], sizes = [4, 32], strides = [1, 1]} : vector<4x128xf32> to vector<4x32xf32>
    %233 = vector.extract_strided_slice %230 {offsets = [0, 64], sizes = [4, 32], strides = [1, 1]} : vector<4x128xf32> to vector<4x32xf32>
    %234 = vector.extract_strided_slice %230 {offsets = [0, 96], sizes = [4, 32], strides = [1, 1]} : vector<4x128xf32> to vector<4x32xf32>
    %235 = arith.mulf %232, %207 : vector<4x32xf32>
    %236 = arith.mulf %231, %233 : vector<4x32xf32>
    %237 = arith.addf %235, %236 : vector<4x32xf32>
    %238 = math.tanh %237 : vector<4x32xf32>
    %239 = arith.mulf %234, %238 : vector<4x32xf32>
    %c20 = arith.constant 20 : index
    %c0_50 = arith.constant 0 : index
    %240 = vector.load %arg13[%c20, %c0_50] : memref<32x32xf32, #tpu.memory_space<vmem>>, vector<4x32xf32>
    tpu.vector_store %arg13[%c20, %c0_50], %239 {strides = array<i32>} : memref<32x32xf32, #tpu.memory_space<vmem>>, vector<4x32xf32>,
    %241 = tpu.concatenate %229, %239 in 1 : vector<4x32xf32>, vector<4x32xf32> -> vector<4x64xf32>
    %c0_51 = arith.constant 0 : index
    %c0_52 = arith.constant 0 : index
    %242 = vector.load %arg6[%c0_51, %c0_52] : memref<64x256xf32, #tpu.memory_space<vmem>>, vector<64x256xf32>
    %cst_53 = arith.constant dense<0.000000e+00> : vector<4x256xf32>
    %243 = tpu.matmul %241, %242, %cst_53 {dimension_numbers = #tpu.dot_dimension_numbers<[1], [0], [0], [1], [0, 0, 1, 1], [], []>} : vector<4x64xf32>, vector<64x256xf32>, vector<4x256xf32> -> vector<4x256xf32>
    %244 = vector.extract_strided_slice %5 {offsets = [28, 0], sizes = [4, 256], strides = [1, 1]} : vector<32x256xf32> to vector<4x256xf32>
    %245 = arith.addf %243, %244 : vector<4x256xf32>
    %246 = arith.mulf %245, %30 : vector<4x256xf32>
    %247 = math.tanh %246 : vector<4x256xf32>
    %248 = arith.mulf %247, %30 : vector<4x256xf32>
    %249 = arith.addf %248, %33 : vector<4x256xf32>
    %250 = vector.extract_strided_slice %249 {offsets = [0, 0], sizes = [4, 128], strides = [1, 1]} : vector<4x256xf32> to vector<4x128xf32>
    %251 = vector.extract_strided_slice %250 {offsets = [0, 0], sizes = [4, 32], strides = [1, 1]} : vector<4x128xf32> to vector<4x32xf32>
    %252 = vector.extract_strided_slice %250 {offsets = [0, 32], sizes = [4, 32], strides = [1, 1]} : vector<4x128xf32> to vector<4x32xf32>
    %253 = vector.extract_strided_slice %250 {offsets = [0, 64], sizes = [4, 32], strides = [1, 1]} : vector<4x128xf32> to vector<4x32xf32>
    %254 = vector.extract_strided_slice %250 {offsets = [0, 96], sizes = [4, 32], strides = [1, 1]} : vector<4x128xf32> to vector<4x32xf32>
    %255 = arith.mulf %252, %227 : vector<4x32xf32>
    %256 = arith.mulf %251, %253 : vector<4x32xf32>
    %257 = arith.addf %255, %256 : vector<4x32xf32>
    %258 = math.tanh %257 : vector<4x32xf32>
    %259 = arith.mulf %254, %258 : vector<4x32xf32>
    %260 = vector.extract_strided_slice %249 {offsets = [0, 128], sizes = [4, 128], strides = [1, 1]} : vector<4x256xf32> to vector<4x128xf32>
    %261 = vector.extract_strided_slice %260 {offsets = [0, 0], sizes = [4, 32], strides = [1, 1]} : vector<4x128xf32> to vector<4x32xf32>
    %262 = vector.extract_strided_slice %260 {offsets = [0, 32], sizes = [4, 32], strides = [1, 1]} : vector<4x128xf32> to vector<4x32xf32>
    %263 = vector.extract_strided_slice %260 {offsets = [0, 64], sizes = [4, 32], strides = [1, 1]} : vector<4x128xf32> to vector<4x32xf32>
    %264 = vector.extract_strided_slice %260 {offsets = [0, 96], sizes = [4, 32], strides = [1, 1]} : vector<4x128xf32> to vector<4x32xf32>
    %265 = arith.mulf %262, %237 : vector<4x32xf32>
    %266 = arith.mulf %261, %263 : vector<4x32xf32>
    %267 = arith.addf %265, %266 : vector<4x32xf32>
    %268 = math.tanh %267 : vector<4x32xf32>
    %269 = arith.mulf %264, %268 : vector<4x32xf32>
    %c24 = arith.constant 24 : index
    %c0_54 = arith.constant 0 : index
    %270 = vector.load %arg13[%c24, %c0_54] : memref<32x32xf32, #tpu.memory_space<vmem>>, vector<4x32xf32>
    tpu.vector_store %arg13[%c24, %c0_54], %269 {strides = array<i32>} : memref<32x32xf32, #tpu.memory_space<vmem>>, vector<4x32xf32>,
    %271 = tpu.concatenate %259, %269 in 1 : vector<4x32xf32>, vector<4x32xf32> -> vector<4x64xf32>
    %c0_55 = arith.constant 0 : index
    %c0_56 = arith.constant 0 : index
    %272 = vector.load %arg6[%c0_55, %c0_56] : memref<64x256xf32, #tpu.memory_space<vmem>>, vector<64x256xf32>
    %cst_57 = arith.constant dense<0.000000e+00> : vector<4x256xf32>
    %273 = tpu.matmul %271, %272, %cst_57 {dimension_numbers = #tpu.dot_dimension_numbers<[1], [0], [0], [1], [0, 0, 1, 1], [], []>} : vector<4x64xf32>, vector<64x256xf32>, vector<4x256xf32> -> vector<4x256xf32>
    %274 = vector.extract_strided_slice %5 {offsets = [28, 0], sizes = [4, 256], strides = [1, 1]} : vector<32x256xf32> to vector<4x256xf32>
    %275 = arith.addf %273, %274 : vector<4x256xf32>
    %276 = arith.mulf %275, %30 : vector<4x256xf32>
    %277 = math.tanh %276 : vector<4x256xf32>
    %278 = arith.mulf %277, %30 : vector<4x256xf32>
    %279 = arith.addf %278, %33 : vector<4x256xf32>
    %280 = vector.extract_strided_slice %279 {offsets = [0, 128], sizes = [4, 128], strides = [1, 1]} : vector<4x256xf32> to vector<4x128xf32>
    %281 = vector.extract_strided_slice %280 {offsets = [0, 0], sizes = [4, 32], strides = [1, 1]} : vector<4x128xf32> to vector<4x32xf32>
    %282 = vector.extract_strided_slice %280 {offsets = [0, 32], sizes = [4, 32], strides = [1, 1]} : vector<4x128xf32> to vector<4x32xf32>
    %283 = vector.extract_strided_slice %280 {offsets = [0, 64], sizes = [4, 32], strides = [1, 1]} : vector<4x128xf32> to vector<4x32xf32>
    %284 = vector.extract_strided_slice %280 {offsets = [0, 96], sizes = [4, 32], strides = [1, 1]} : vector<4x128xf32> to vector<4x32xf32>
    %285 = arith.mulf %282, %267 : vector<4x32xf32>
    %286 = arith.mulf %281, %283 : vector<4x32xf32>
    %287 = arith.addf %285, %286 : vector<4x32xf32>
    %288 = math.tanh %287 : vector<4x32xf32>
    %289 = arith.mulf %284, %288 : vector<4x32xf32>
    %c28 = arith.constant 28 : index
    %c0_58 = arith.constant 0 : index
    %290 = vector.load %arg13[%c28, %c0_58] : memref<32x32xf32, #tpu.memory_space<vmem>>, vector<4x32xf32>
    tpu.vector_store %arg13[%c28, %c0_58], %289 {strides = array<i32>} : memref<32x32xf32, #tpu.memory_space<vmem>>, vector<4x32xf32>,
    %c0_59 = arith.constant 0 : index
    %c0_60 = arith.constant 0 : index
    %c0_61 = arith.constant 0 : index
    %291 = vector.load %arg11[%c0_59, %c0_60, %c0_61] : memref<2x4x32xf32, #tpu.memory_space<vmem>>, vector<1x4x32xf32>
    %292 = vector.shape_cast %291 : vector<1x4x32xf32> to vector<4x32xf32>
    %293 = vector.shape_cast %259 : vector<4x32xf32> to vector<1x4x32xf32>
    tpu.vector_store %arg11[%c0_59, %c0_60, %c0_61], %293 {strides = array<i32>} : memref<2x4x32xf32, #tpu.memory_space<vmem>>, vector<1x4x32xf32>,
    %c0_62 = arith.constant 0 : index
    %c0_63 = arith.constant 0 : index
    %c0_64 = arith.constant 0 : index
    %294 = vector.load %arg12[%c0_62, %c0_63, %c0_64] : memref<2x4x32xf32, #tpu.memory_space<vmem>>, vector<1x4x32xf32>
    %295 = vector.shape_cast %294 : vector<1x4x32xf32> to vector<4x32xf32>
    %296 = vector.shape_cast %257 : vector<4x32xf32> to vector<1x4x32xf32>
    tpu.vector_store %arg12[%c0_62, %c0_63, %c0_64], %296 {strides = array<i32>} : memref<2x4x32xf32, #tpu.memory_space<vmem>>, vector<1x4x32xf32>,
    %c1_65 = arith.constant 1 : index
    %c0_66 = arith.constant 0 : index
    %c0_67 = arith.constant 0 : index
    %297 = vector.load %arg11[%c1_65, %c0_66, %c0_67] : memref<2x4x32xf32, #tpu.memory_space<vmem>>, vector<1x4x32xf32>
    %298 = vector.shape_cast %297 : vector<1x4x32xf32> to vector<4x32xf32>
    %299 = vector.shape_cast %289 : vector<4x32xf32> to vector<1x4x32xf32>
    tpu.vector_store %arg11[%c1_65, %c0_66, %c0_67], %299 {strides = array<i32>} : memref<2x4x32xf32, #tpu.memory_space<vmem>>, vector<1x4x32xf32>,
    %c1_68 = arith.constant 1 : index
    %c0_69 = arith.constant 0 : index
    %c0_70 = arith.constant 0 : index
    %300 = vector.load %arg12[%c1_68, %c0_69, %c0_70] : memref<2x4x32xf32, #tpu.memory_space<vmem>>, vector<1x4x32xf32>
    %301 = vector.shape_cast %300 : vector<1x4x32xf32> to vector<4x32xf32>
    %302 = vector.shape_cast %287 : vector<4x32xf32> to vector<1x4x32xf32>
    tpu.vector_store %arg12[%c1_68, %c0_69, %c0_70], %302 {strides = array<i32>} : memref<2x4x32xf32, #tpu.memory_space<vmem>>, vector<1x4x32xf32>,
    %c0_71 = arith.constant 0 : index
    %c0_72 = arith.constant 0 : index
    %303 = vector.load %arg13[%c0_71, %c0_72] : memref<32x32xf32, #tpu.memory_space<vmem>>, vector<32x32xf32>
    %c0_73 = arith.constant 0 : index
    %c0_74 = arith.constant 0 : index
    %304 = vector.load %arg7[%c0_73, %c0_74] : memref<32x128xf32, #tpu.memory_space<vmem>>, vector<32x128xf32>
    %cst_75 = arith.constant dense<0.000000e+00> : vector<32x128xf32>
    %305 = tpu.matmul %303, %304, %cst_75 {dimension_numbers = #tpu.dot_dimension_numbers<[1], [0], [0], [1], [0, 0, 1, 1], [], []>} : vector<32x32xf32>, vector<32x128xf32>, vector<32x128xf32> -> vector<32x128xf32>
    %c0_76 = arith.constant 0 : index
    %c0_77 = arith.constant 0 : index
    %306 = vector.load %arg8[%c0_76, %c0_77] : memref<1x128xf32, #tpu.memory_space<vmem>>, vector<1x128xf32>
    %307 = vector.broadcast %306 : vector<1x128xf32> to vector<32x128xf32>
    %308 = arith.addf %305, %307 : vector<32x128xf32>
    %309 = math.exp %308 : vector<32x128xf32>
    %cst_78 = arith.constant 0.000000e+00 : f32
    %310 = vector.broadcast %cst_78 : f32 to vector<32x128xf32>
    %311 = arith.subf %310, %309 : vector<32x128xf32>
    %c0_79 = arith.constant 0 : index
    %c0_80 = arith.constant 0 : index
    %312 = vector.load %arg10[%c0_79, %c0_80] : memref<32x128xf32, #tpu.memory_space<vmem>>, vector<32x128xf32>
    tpu.vector_store %arg10[%c0_79, %c0_80], %311 {strides = array<i32>} : memref<32x128xf32, #tpu.memory_space<vmem>>, vector<32x128xf32>,
    %c0_81 = arith.constant 0 : index
    %c0_82 = arith.constant 0 : index
    %313 = vector.load %arg1[%c0_81, %c0_82] : memref<32x128xf32, #tpu.memory_space<vmem>>, vector<32x128xf32>
    %314 = arith.addf %313, %311 : vector<32x128xf32>
    %c0_83 = arith.constant 0 : index
    %c0_84 = arith.constant 0 : index
    %315 = vector.load %arg9[%c0_83, %c0_84] : memref<32x128xf32, #tpu.memory_space<vmem>>, vector<32x128xf32>
    tpu.vector_store %arg9[%c0_83, %c0_84], %314 {strides = array<i32>} : memref<32x128xf32, #tpu.memory_space<vmem>>, vector<32x128xf32>,
    return
  }
}

</mosaic_0001>

<llo_original>
// kernel: fwd.1
$region0: #{fwd.1}
  #allocation0 [shape = 'u32[]', space=smem, size = 0x4, offset = 0x4, fixed_abs, tag = 'smem constant byte address 0x4 - core index']
  #allocation1 [shape = 'u32[144,128]{1,0:T(1,128)}', space=vmem, size = 0x12000, scoped, tag = 'internal scratch']
  #allocation2 [shape = 'f32[32,32]{1,0:T(8,128)}', space=vmem, size = 0x4000, scoped, tag = 'scratch operand']
  %s0 = inlined_call_operand.vmem [shape: f32[32,32], index: 0, kind: input, shape index: {}]
  %s1 = inlined_call_operand.vmem [shape: f32[32,128], index: 1, kind: input, shape index: {}]
  %s2 = inlined_call_operand.vmem [shape: f32[2,4,32], index: 2, kind: input, shape index: {}]
  %s3 = inlined_call_operand.hbm [shape: f32[2,4,32], index: 3, kind: input, shape index: {}]
  %s4 = inlined_call_operand.hbm [shape: f32[32,256], index: 4, kind: input, shape index: {}]
  %s5 = inlined_call_operand.hbm [shape: f32[1,256], index: 5, kind: input, shape index: {}]
  %s6 = inlined_call_operand.vmem [shape: f32[64,256], index: 6, kind: input, shape index: {}]
  %s7 = inlined_call_operand.hbm [shape: f32[32,128], index: 7, kind: input, shape index: {}]
  %s8 = inlined_call_operand.vmem [shape: f32[1,128], index: 8, kind: input, shape index: {}]
  %s9 = inlined_call_operand.vmem [shape: f32[32,128], index: 9, kind: output, shape index: {0}]
  %s10 = inlined_call_operand.vmem [shape: f32[32,128], index: 10, kind: output, shape index: {1}]
  %s11 = inlined_call_operand.hbm [shape: f32[2,4,32], index: 11, kind: output, shape index: {2}]
  %s12 = inlined_call_operand.hbm [shape: f32[2,4,32], index: 12, kind: output, shape index: {3}]
  %13 = xla_tuple %s9, %s10, %s11, %s12
  %s14 = sld [smem:[#allocation0]]
  $region86: #{fwd.1} parent=0
    _
  %s16 = ssub.s32 1, %s14
  %s17 = scalar_select 0, %s16, %s14
  $region1: #{fwd.1} parent=0
    #allocation3 [shape = 'u8[4096]{0}', space=vmem, size = 0x1000, scoped, tag = 'input window, operand 3, single buffered']
    #allocation4 [shape = 's32[1]{0}', space=sflag, size = 0x4, scoped, tag = 'scoped memory for fwd.1']
    #allocation5 [shape = 's32[1]{0}', space=sflag, size = 0x4, scoped, tag = 'scoped memory for fwd.1']
    #allocation6 [shape = 'u8[32768]{0}', space=vmem, size = 0x8000, scoped, tag = 'input window, operand 4, single buffered']
    #allocation7 [shape = 's32[1]{0}', space=sflag, size = 0x4, scoped, tag = 'scoped memory for fwd.1']
    #allocation8 [shape = 'u8[1024]{0}', space=vmem, size = 0x400, scoped, tag = 'input window, operand 5, single buffered']
    #allocation9 [shape = 'u8[16384]{0}', space=vmem, size = 0x4000, scoped, tag = 'input window, operand 7, single buffered']
    #allocation10 [shape = 's32[1]{0}', space=sflag, size = 0x4, scoped, tag = 'scoped memory for fwd.1']
    #allocation11 [shape = 'u8[4096]{0}', space=vmem, size = 0x1000, scoped, tag = 'output window, operand 2, single buffered']
    #allocation12 [shape = 'u8[4096]{0}', space=vmem, size = 0x1000, scoped, tag = 'output window, operand 3, single buffered']
    #allocation13 [shape = 's32[1]{0}', space=sflag, size = 0x4, scoped, tag = 'scoped memory for fwd.1']
    %18 = vsyncpa [#allocation4], 0
    %19 = vsyncpa [#allocation7], 0
    %20 = vsyncpa [#allocation10], 0
    %21 = vsyncpa [#allocation5], 0
    %22 = vsyncpa [#allocation13], 0
    // Predicated region
    $region2: #{fwd.1} parent=1 // pred_check
      _
    $region3: #{fwd.1} parent=1 // pred_check_branch
      %24 = sbr.rel (0) target = $region5
    $region4: #{fwd.1} parent=1 // pred_region
      _
    $region5: #{fwd.1} parent=1 // pred_fallthru
      _
    // Predicated region
    $region6: #{fwd.1} parent=1 // pred_check
      _
    $region7: #{fwd.1} parent=1 // pred_check_branch
      %26 = sbr.rel (0) target = $region9
    $region8: #{fwd.1} parent=1 // pred_region
      _
    $region9: #{fwd.1} parent=1 // pred_fallthru
      _
    // Predicated region
    $region10: #{fwd.1} parent=1 // pred_check
      _
    $region11: #{fwd.1} parent=1 // pred_check_branch
      %28 = sbr.rel (0) target = $region13
    $region12: #{fwd.1} parent=1 // pred_region
      _
    $region13: #{fwd.1} parent=1 // pred_fallthru
      _
    // Predicated region
    $region14: #{fwd.1} parent=1 // pred_check
      _
    $region15: #{fwd.1} parent=1 // pred_check_branch
      %30 = sbr.rel (0) target = $region17
    $region16: #{fwd.1} parent=1 // pred_region
      %s32 = ssub.s32 128, 128
      %33 = vsyncadd [#allocation4], %s32
      %s34 = sshll.u32 [#allocation3], 4
      %s35 = int_to_ptr.vmem [resolvable:$true] %s34
      %40 = dma.hbm_to_vmem [thread:$0]  %s3, 128, %s35, [#allocation4], 64, 64, 4
    $region17: #{fwd.1} parent=1 // pred_fallthru
      _
    // Predicated region
    $region18: #{fwd.1} parent=1 // pred_check
      _
    $region19: #{fwd.1} parent=1 // pred_check_branch
      %42 = sbr.rel (0) target = $region21
    $region20: #{fwd.1} parent=1 // pred_region
      %s44 = ssub.s32 1024, 1024
      %45 = vsyncadd [#allocation7], %s44
      %s46 = sshll.u32 [#allocation6], 4
      %s47 = int_to_ptr.vmem [resolvable:$true] %s46
      %52 = dma.hbm_to_vmem [thread:$0]  %s4, 1024, %s47, [#allocation7], 256, 256, 16
    $region21: #{fwd.1} parent=1 // pred_fallthru
      _
    // Predicated region
    $region22: #{fwd.1} parent=1 // pred_check
      _
    $region23: #{fwd.1} parent=1 // pred_check_branch
      %54 = sbr.rel (0) target = $region25
    $region24: #{fwd.1} parent=1 // pred_region
      %s56 = ssub.s32 32, 32
      %57 = vsyncadd [#allocation7], %s56
      %s59 = sshll.u32 [#allocation8], 4
      %s60 = int_to_ptr.vmem [resolvable:$true] %s59
      %62 = dma.hbm_to_vmem [thread:$0]  %s5, 32, %s60, [#allocation7]
    $region25: #{fwd.1} parent=1 // pred_fallthru
      _
    // Predicated region
    $region26: #{fwd.1} parent=1 // pred_check
      _
    $region27: #{fwd.1} parent=1 // pred_check_branch
      %64 = sbr.rel (0) target = $region29
    $region28: #{fwd.1} parent=1 // pred_region
      _
    $region29: #{fwd.1} parent=1 // pred_fallthru
      _
    // Predicated region
    $region30: #{fwd.1} parent=1 // pred_check
      _
    $region31: #{fwd.1} parent=1 // pred_check_branch
      %66 = sbr.rel (0) target = $region33
    $region32: #{fwd.1} parent=1 // pred_region
      %s68 = ssub.s32 512, 512
      %69 = vsyncadd [#allocation10], %s68
      %s70 = sshll.u32 [#allocation9], 4
      %s71 = int_to_ptr.vmem [resolvable:$true] %s70
      %76 = dma.hbm_to_vmem [thread:$0]  %s7, 512, %s71, [#allocation10], 128, 128, 8
    $region33: #{fwd.1} parent=1 // pred_fallthru
      _
    // Predicated region
    $region34: #{fwd.1} parent=1 // pred_check
      _
    $region35: #{fwd.1} parent=1 // pred_check_branch
      %78 = sbr.rel (0) target = $region37
    $region36: #{fwd.1} parent=1 // pred_region
      _
    $region37: #{fwd.1} parent=1 // pred_fallthru
      _
    // Predicated region
    $region38: #{fwd.1} parent=1 // pred_check
      _
    $region39: #{fwd.1} parent=1 // pred_check_branch
      %80 = sbr.rel (0) target = $region41
    $region40: #{fwd.1} parent=1 // pred_region
      %81 = dma.done [#allocation4], 128
    $region41: #{fwd.1} parent=1 // pred_fallthru
      _
    // Predicated region
    $region42: #{fwd.1} parent=1 // pred_check
      _
    $region43: #{fwd.1} parent=1 // pred_check_branch
      %83 = sbr.rel (0) target = $region45
    $region44: #{fwd.1} parent=1 // pred_region
      %84 = dma.done [#allocation7], 1024
    $region45: #{fwd.1} parent=1 // pred_fallthru
      _
    // Predicated region
    $region46: #{fwd.1} parent=1 // pred_check
      _
    $region47: #{fwd.1} parent=1 // pred_check_branch
      %86 = sbr.rel (0) target = $region49
    $region48: #{fwd.1} parent=1 // pred_region
      %87 = dma.done [#allocation7], 32
    $region49: #{fwd.1} parent=1 // pred_fallthru
      _
    // Predicated region
    $region50: #{fwd.1} parent=1 // pred_check
      _
    $region51: #{fwd.1} parent=1 // pred_check_branch
      %89 = sbr.rel (0) target = $region53
    $region52: #{fwd.1} parent=1 // pred_region
      %90 = dma.done [#allocation10], 512
    $region53: #{fwd.1} parent=1 // pred_fallthru
      _
    %v91 = vld [vmem:[%s0] sm:$0xff]
    %v92 = vld [vmem:[%s0 + $0x8] sm:$0xff]
    %v93 = vld [vmem:[%s0 + $0x10] sm:$0xff]
    %v94 = vld [vmem:[%s0 + $0x18] sm:$0xff]
    %v95 = vld [vmem:[#allocation6] sm:$0xff]
    %v96 = vld [vmem:[#allocation6 + $0x8] sm:$0xff]
    %v97 = vld [vmem:[#allocation6 + $0x10] sm:$0xff]
    %v98 = vld [vmem:[#allocation6 + $0x18] sm:$0xff]
    %v99 = vld [vmem:[#allocation6 + $0x20] sm:$0xff]
    %v100 = vld [vmem:[#allocation6 + $0x28] sm:$0xff]
    %v101 = vld [vmem:[#allocation6 + $0x30] sm:$0xff]
    %v102 = vld [vmem:[#allocation6 + $0x38] sm:$0xff]
    %v103 = vld [vmem:[#allocation8] sm:$0x3]
    %v105 = vlaneseq
    %v106 = vshrl.u32 %v105, 7
    %v107 = vsub.s32 0, %v106
    %v108 = vrot.slane %v103, %v107
    %v109 = vlaneseq
    %v110 = vshrl.u32 %v109, 7
    %v111 = vsub.s32 1, %v110
    %v112 = vrot.slane %v103, %v111
    %vm115 = vcmask 261120
    %v117 = vsel %vm115, %v91, 0
    %v120 = vsel %vm115, %v92, 0
    %v123 = vsel %vm115, %v93, 0
    %v126 = vsel %vm115, %v94, 0
    %128 = vmatprep.subr.mxu0 0.0
    %129 = vmatpush1.msra.mxu0 0.0
    %130 = vmatprep.subr.mxu0 0.0
    %131 = vmatpush1.msra.mxu0 0.0
    %132 = vmatprep.subr.mxu0 0.0
    %133 = vmatpush1.msra.mxu0 0.0
    %134 = vmatprep.subr.mxu0 0.0
    %135 = vmatpush1.msra.mxu0 0.0
    %136 = vmatprep.subr.mxu0 0.0
    %137 = vmatpush1.msra.mxu0 0.0
    %138 = vmatprep.subr.mxu0 0.0
    %139 = vmatpush1.msra.mxu0 0.0
    %140 = vmatprep.subr.mxu0 0.0
    %141 = vmatpush1.msra.mxu0 0.0
    %142 = vmatprep.subr.mxu0 0.0
    %143 = vmatpush1.msra.mxu0 0.0
    %144 = vmatprep.subr.mxu0 0.0
    %145 = vmatpush1.msra.mxu0 0.0
    %146 = vmatprep.subr.mxu0 0.0
    %147 = vmatpush1.msra.mxu0 0.0
    %148 = vmatprep.subr.mxu0 0.0
    %149 = vmatpush1.msra.mxu0 0.0
    %150 = vmatprep.subr.mxu0 0.0
    %151 = vmatpush1.msra.mxu0 0.0
    %152 = vmatprep.subr.mxu0 %v102
    %153 = vmatpush1.msra.mxu0 %v101
    %154 = vmatprep.subr.mxu0 %v100
    %155 = vmatpush1.msra.mxu0 %v99
    %156 = vmatprep.subr.mxu0 %v98
    %157 = vmatpush1.msra.mxu0 %v97
    %158 = vmatprep.subr.mxu0 %v96
    %159 = vmatpush1.msra.mxu0 %v95
    %160 = vmatprep.subr.mxu0 0.0
    %161 = vmatpush2.msra.mxu0 0.0
    %162 = vmatprep.subr.mxu0 0.0
    %163 = vmatpush2.msra.mxu0 0.0
    %164 = vmatprep.subr.mxu0 0.0
    %165 = vmatpush2.msra.mxu0 0.0
    %166 = vmatprep.subr.mxu0 0.0
    %167 = vmatpush2.msra.mxu0 0.0
    %168 = vmatprep.subr.mxu0 0.0
    %169 = vmatpush2.msra.mxu0 0.0
    %170 = vmatprep.subr.mxu0 0.0
    %171 = vmatpush2.msra.mxu0 0.0
    %172 = vmatprep.subr.mxu0 0.0
    %173 = vmatpush2.msra.mxu0 0.0
    %174 = vmatprep.subr.mxu0 0.0
    %175 = vmatpush2.msra.mxu0 0.0
    %176 = vmatprep.subr.mxu0 0.0
    %177 = vmatpush2.msra.mxu0 0.0
    %178 = vmatprep.subr.mxu0 0.0
    %179 = vmatpush2.msra.mxu0 0.0
    %180 = vmatprep.subr.mxu0 0.0
    %181 = vmatpush2.msra.mxu0 0.0
    %182 = vmatprep.subr.mxu0 0.0
    %183 = vmatpush2.msra.mxu0 0.0
    %184 = vmatprep.subr.mxu0 0.0
    %185 = vmatpush2.msra.mxu0 0.0
    %186 = vmatprep.subr.mxu0 0.0
    %187 = vmatpush2.msra.mxu0 0.0
    %188 = vmatprep.subr.mxu0 0.0
    %189 = vmatpush2.msra.mxu0 0.0
    %190 = vmatprep.subr.mxu0 0.0
    %191 = vmatpush2.msra.mxu0 0.0
    %192 = vmatprep.mubr.f32.mxu0 0.0
    %193 = vmatmul.mubr.f32.gmra.mxu0 %v117
    %v194 = vpop.f32.mrf.mxu0
    %v195 = vadd.f32 %v108, %v194
    %v196 = vpop.f32.mrf.mxu0
    %v197 = vadd.f32 %v112, %v196
    %198 = vmatprep.mubr.f32.mxu0 0.0
    %199 = vmatmul.mubr.f32.gmra.mxu0 %v120
    %v200 = vpop.f32.mrf.mxu0
    %v201 = vadd.f32 %v108, %v200
    %v202 = vpop.f32.mrf.mxu0
    %v203 = vadd.f32 %v112, %v202
    %204 = vmatprep.mubr.f32.mxu0 0.0
    %205 = vmatmul.mubr.f32.gmra.mxu0 %v123
    %v206 = vpop.f32.mrf.mxu0
    %v207 = vadd.f32 %v108, %v206
    %v208 = vpop.f32.mrf.mxu0
    %v209 = vadd.f32 %v112, %v208
    %210 = vmatprep.mubr.f32.mxu0 0.0
    %211 = vmatmul.mubr.f32.gmra.mxu0 %v126
    %v212 = vpop.f32.mrf.mxu0
    %v213 = vadd.f32 %v108, %v212
    %v214 = vpop.f32.mrf.mxu0
    %v215 = vadd.f32 %v112, %v214
    %216 = vdwg.mxu0
    %v217 = vlaneseq
    %v218 = vand.u32 %v217, 127
    %v219 = vadd.s32 %v218, 128
    %vm220 = vcmp.lt.s32.totalorder %v218, 0
    %v221 = vsub.s32 0, %v218
    %v222 = vsel %vm220, %v221, %v218
    %v223 = vshrl.u32 %v222, 7
    %v224 = vand.u32 %v222, 127
    %v225 = vsub.s32 0, %v224
    %v226 = vsel %vm220, %v225, %v224
    %vm227 = vcmp.lt.s32.totalorder %v219, 0
    %v228 = vsub.s32 0, %v219
    %v229 = vsel %vm227, %v228, %v219
    %v230 = vshrl.u32 %v229, 7
    %v231 = vand.u32 %v229, 127
    %v232 = vsub.s32 0, %v231
    %v233 = vsel %vm227, %v232, %v231
    %vm234 = vcmp.ne.s32.totalorder %v226, 0
    %vm235 = vcmp.ne.s32.totalorder %v233, 0
    %vm236 = vcmp.lt.s32.totalorder %v226, 0
    %vm237 = vcmp.lt.s32.totalorder %v233, 0
    %vm238 = vmand %vm236, %vm234
    %vm239 = vmand %vm237, %vm235
    %v240 = vadd.s32 %v226, 128
    %v241 = vadd.s32 %v233, 128
    %v242 = vsel %vm238, %v240, %v226
    %v243 = vsel %vm239, %v241, %v233
    %vm244 = vcmp.ge.s32.totalorder %v242, 64
    %vm245 = vcmp.ge.s32.totalorder %v243, 64
    %vm246 = vcmp.lt.s32.totalorder %v242, 96
    %vm247 = vcmp.lt.s32.totalorder %v243, 96
    %vm248 = vmand %vm244, %vm246
    %vm249 = vmand %vm245, %vm247
    %v250 = vsel %vm248, 1.0, 0.5
    %v251 = vsel %vm249, 1.0, 0.5
    %v252 = vsel %vm248, 0.0, 0.5
    %v253 = vsel %vm249, 0.0, 0.5
    %v254 = vld [vmem:[%s2] sm:$0xf]
    %s255 = scalar_lea.vmem %s2, 4
    %v256 = vld [vmem:[%s255] sm:$0xf]
    %v257 = vld [vmem:[#allocation3] sm:$0xf]
    %s258 = scalar_lea.vmem [#allocation3], 4
    %v259 = vld [vmem:[%s258] sm:$0xf]
    %261 = vrot.lane.b32.xlu0 %v256, 32
    %v262 = vpop.permute.xlu0 %261
    %v264 = vsel %vm115, %v254, %v262
    %v265 = vld [vmem:[%s6] sm:$0xff]
    %v266 = vld [vmem:[%s6 + $0x8] sm:$0xff]
    %v267 = vld [vmem:[%s6 + $0x10] sm:$0xff]
    %v268 = vld [vmem:[%s6 + $0x18] sm:$0xff]
    %v269 = vld [vmem:[%s6 + $0x20] sm:$0xff]
    %v270 = vld [vmem:[%s6 + $0x28] sm:$0xff]
    %v271 = vld [vmem:[%s6 + $0x30] sm:$0xff]
    %v272 = vld [vmem:[%s6 + $0x38] sm:$0xff]
    %v273 = vld [vmem:[%s6 + $0x40] sm:$0xff]
    %v274 = vld [vmem:[%s6 + $0x48] sm:$0xff]
    %v275 = vld [vmem:[%s6 + $0x50] sm:$0xff]
    %v276 = vld [vmem:[%s6 + $0x58] sm:$0xff]
    %v277 = vld [vmem:[%s6 + $0x60] sm:$0xff]
    %v278 = vld [vmem:[%s6 + $0x68] sm:$0xff]
    %v279 = vld [vmem:[%s6 + $0x70] sm:$0xff]
    %v280 = vld [vmem:[%s6 + $0x78] sm:$0xff]
    %vm281 = vcmask 523264
    %v283 = vsel %vm281, %v264, 0
    %285 = vmatprep.subr.mxu0 0.0
    %286 = vmatpush1.msra.mxu0 0.0
    %287 = vmatprep.subr.mxu0 0.0
    %288 = vmatpush1.msra.mxu0 0.0
    %289 = vmatprep.subr.mxu0 0.0
    %290 = vmatpush1.msra.mxu0 0.0
    %291 = vmatprep.subr.mxu0 0.0
    %292 = vmatpush1.msra.mxu0 0.0
    %293 = vmatprep.subr.mxu0 0.0
    %294 = vmatpush1.msra.mxu0 0.0
    %295 = vmatprep.subr.mxu0 0.0
    %296 = vmatpush1.msra.mxu0 0.0
    %297 = vmatprep.subr.mxu0 0.0
    %298 = vmatpush1.msra.mxu0 0.0
    %299 = vmatprep.subr.mxu0 0.0
    %300 = vmatpush1.msra.mxu0 0.0
    %301 = vmatprep.subr.mxu0 %v280
    %302 = vmatpush1.msra.mxu0 %v279
    %303 = vmatprep.subr.mxu0 %v278
    %304 = vmatpush1.msra.mxu0 %v277
    %305 = vmatprep.subr.mxu0 %v276
    %306 = vmatpush1.msra.mxu0 %v275
    %307 = vmatprep.subr.mxu0 %v274
    %308 = vmatpush1.msra.mxu0 %v273
    %309 = vmatprep.subr.mxu0 %v272
    %310 = vmatpush1.msra.mxu0 %v271
    %311 = vmatprep.subr.mxu0 %v270
    %312 = vmatpush1.msra.mxu0 %v269
    %313 = vmatprep.subr.mxu0 %v268
    %314 = vmatpush1.msra.mxu0 %v267
    %315 = vmatprep.subr.mxu0 %v266
    %316 = vmatpush1.msra.mxu0 %v265
    %317 = vmatprep.subr.mxu0 0.0
    %318 = vmatpush2.msra.mxu0 0.0
    %319 = vmatprep.subr.mxu0 0.0
    %320 = vmatpush2.msra.mxu0 0.0
    %321 = vmatprep.subr.mxu0 0.0
    %322 = vmatpush2.msra.mxu0 0.0
    %323 = vmatprep.subr.mxu0 0.0
    %324 = vmatpush2.msra.mxu0 0.0
    %325 = vmatprep.subr.mxu0 0.0
    %326 = vmatpush2.msra.mxu0 0.0
    %327 = vmatprep.subr.mxu0 0.0
    %328 = vmatpush2.msra.mxu0 0.0
    %329 = vmatprep.subr.mxu0 0.0
    %330 = vmatpush2.msra.mxu0 0.0
    %331 = vmatprep.subr.mxu0 0.0
    %332 = vmatpush2.msra.mxu0 0.0
    %333 = vmatprep.subr.mxu0 0.0
    %334 = vmatpush2.msra.mxu0 0.0
    %335 = vmatprep.subr.mxu0 0.0
    %336 = vmatpush2.msra.mxu0 0.0
    %337 = vmatprep.subr.mxu0 0.0
    %338 = vmatpush2.msra.mxu0 0.0
    %339 = vmatprep.subr.mxu0 0.0
    %340 = vmatpush2.msra.mxu0 0.0
    %341 = vmatprep.subr.mxu0 0.0
    %342 = vmatpush2.msra.mxu0 0.0
    %343 = vmatprep.subr.mxu0 0.0
    %344 = vmatpush2.msra.mxu0 0.0
    %345 = vmatprep.subr.mxu0 0.0
    %346 = vmatpush2.msra.mxu0 0.0
    %347 = vmatprep.subr.mxu0 0.0
    %348 = vmatpush2.msra.mxu0 0.0
    %349 = vmatprep.mubr.f32.mxu0 0.0
    %350 = vmatmul.mubr.f32.gmra.mxu0 %v283
    %v351 = vpop.f32.mrf.mxu0
    %v352 = vadd.f32 %v195, %v351
    %v353 = vpop.f32.mrf.mxu0
    %354 = vdwg.mxu0
    %v355 = vmul.f32 %v352, %v250
    %v356 = vtanh.pop %v355
    %v357 = vmul.f32 %v356, %v250
    %v358 = vadd.f32 %v357, %v252
    %360 = vrot.lane.b32.xlu0 %v257, 32
    %v361 = vpop.permute.xlu0 %360
    %v363 = vmul.f32 %v358, %v361
    %365 = vrot.lane.b32.xlu0 %v358, 64
    %v366 = vpop.permute.xlu0 %365
    %v368 = vmul.f32 %v358, %v366
    %370 = vrot.lane.b32.xlu0 %v368, 32
    %v371 = vpop.permute.xlu0 %370
    %v373 = vadd.f32 %v363, %v371
    %v374 = vtanh.pop %v373
    %376 = vrot.lane.b32.xlu0 %v374, 64
    %v377 = vpop.permute.xlu0 %376
    %v379 = vmul.f32 %v358, %v377
    %381 = vrot.lane.b32.xlu0 %v379, 32
    %v382 = vpop.permute.xlu0 %381
    %v384 = vsel %vm115, %v382, %v262
    %v387 = vrot.slane %v195, 4
    %v388 = vrot.slane %v197, 4
    %v392 = vsel %vm281, %v384, 0
    %394 = vmatprep.subr.mxu0 0.0
    %395 = vmatpush1.msra.mxu0 0.0
    %396 = vmatprep.subr.mxu0 0.0
    %397 = vmatpush1.msra.mxu0 0.0
    %398 = vmatprep.subr.mxu0 0.0
    %399 = vmatpush1.msra.mxu0 0.0
    %400 = vmatprep.subr.mxu0 0.0
    %401 = vmatpush1.msra.mxu0 0.0
    %402 = vmatprep.subr.mxu0 0.0
    %403 = vmatpush1.msra.mxu0 0.0
    %404 = vmatprep.subr.mxu0 0.0
    %405 = vmatpush1.msra.mxu0 0.0
    %406 = vmatprep.subr.mxu0 0.0
    %407 = vmatpush1.msra.mxu0 0.0
    %408 = vmatprep.subr.mxu0 0.0
    %409 = vmatpush1.msra.mxu0 0.0
    %410 = vmatprep.subr.mxu0 %v280
    %411 = vmatpush1.msra.mxu0 %v279
    %412 = vmatprep.subr.mxu0 %v278
    %413 = vmatpush1.msra.mxu0 %v277
    %414 = vmatprep.subr.mxu0 %v276
    %415 = vmatpush1.msra.mxu0 %v275
    %416 = vmatprep.subr.mxu0 %v274
    %417 = vmatpush1.msra.mxu0 %v273
    %418 = vmatprep.subr.mxu0 %v272
    %419 = vmatpush1.msra.mxu0 %v271
    %420 = vmatprep.subr.mxu0 %v270
    %421 = vmatpush1.msra.mxu0 %v269
    %422 = vmatprep.subr.mxu0 %v268
    %423 = vmatpush1.msra.mxu0 %v267
    %424 = vmatprep.subr.mxu0 %v266
    %425 = vmatpush1.msra.mxu0 %v265
    %426 = vmatprep.subr.mxu0 0.0
    %427 = vmatpush2.msra.mxu0 0.0
    %428 = vmatprep.subr.mxu0 0.0
    %429 = vmatpush2.msra.mxu0 0.0
    %430 = vmatprep.subr.mxu0 0.0
    %431 = vmatpush2.msra.mxu0 0.0
    %432 = vmatprep.subr.mxu0 0.0
    %433 = vmatpush2.msra.mxu0 0.0
    %434 = vmatprep.subr.mxu0 0.0
    %435 = vmatpush2.msra.mxu0 0.0
    %436 = vmatprep.subr.mxu0 0.0
    %437 = vmatpush2.msra.mxu0 0.0
    %438 = vmatprep.subr.mxu0 0.0
    %439 = vmatpush2.msra.mxu0 0.0
    %440 = vmatprep.subr.mxu0 0.0
    %441 = vmatpush2.msra.mxu0 0.0
    %442 = vmatprep.subr.mxu0 0.0
    %443 = vmatpush2.msra.mxu0 0.0
    %444 = vmatprep.subr.mxu0 0.0
    %445 = vmatpush2.msra.mxu0 0.0
    %446 = vmatprep.subr.mxu0 0.0
    %447 = vmatpush2.msra.mxu0 0.0
    %448 = vmatprep.subr.mxu0 0.0
    %449 = vmatpush2.msra.mxu0 0.0
    %450 = vmatprep.subr.mxu0 0.0
    %451 = vmatpush2.msra.mxu0 0.0
    %452 = vmatprep.subr.mxu0 0.0
    %453 = vmatpush2.msra.mxu0 0.0
    %454 = vmatprep.subr.mxu0 0.0
    %455 = vmatpush2.msra.mxu0 0.0
    %456 = vmatprep.subr.mxu0 0.0
    %457 = vmatpush2.msra.mxu0 0.0
    %458 = vmatprep.mubr.f32.mxu0 0.0
    %459 = vmatmul.mubr.f32.gmra.mxu0 %v392
    %v460 = vpop.f32.mrf.mxu0
    %v461 = vadd.f32 %v387, %v460
    %v462 = vpop.f32.mrf.mxu0
    %v463 = vadd.f32 %v388, %v462
    %464 = vdwg.mxu0
    %v465 = vmul.f32 %v461, %v250
    %v466 = vmul.f32 %v463, %v251
    %v467 = vtanh.pop %v465
    %v468 = vtanh.pop %v466
    %v469 = vmul.f32 %v467, %v250
    %v470 = vmul.f32 %v468, %v251
    %v471 = vadd.f32 %v469, %v252
    %v472 = vadd.f32 %v470, %v253
    %v473 = vmul.f32 %v471, %v373
    %475 = vrot.lane.b32.xlu0 %v471, 64
    %v476 = vpop.permute.xlu0 %475
    %v478 = vmul.f32 %v471, %v476
    %480 = vrot.lane.b32.xlu0 %v478, 32
    %v481 = vpop.permute.xlu0 %480
    %v483 = vadd.f32 %v473, %v481
    %v484 = vtanh.pop %v483
    %486 = vrot.lane.b32.xlu0 %v484, 64
    %v487 = vpop.permute.xlu0 %486
    %v489 = vmul.f32 %v471, %v487
    %491 = vrot.lane.b32.xlu0 %v259, 32
    %v492 = vpop.permute.xlu0 %491
    %v494 = vmul.f32 %v472, %v492
    %496 = vrot.lane.b32.xlu0 %v472, 64
    %v497 = vpop.permute.xlu0 %496
    %v499 = vmul.f32 %v472, %v497
    %501 = vrot.lane.b32.xlu0 %v499, 32
    %v502 = vpop.permute.xlu0 %501
    %v504 = vadd.f32 %v494, %v502
    %v505 = vtanh.pop %v504
    %507 = vrot.lane.b32.xlu0 %v505, 64
    %v508 = vpop.permute.xlu0 %507
    %v510 = vmul.f32 %v472, %v508
    %512 = vrot.lane.b32.xlu0 %v510, 32
    %v513 = vpop.permute.xlu0 %512
    %vm515 = vcmask 257024
    %516 = vst.msk [vmem:[#allocation2] sm:$0xf] %vm515, %v513
    %518 = vrot.lane.b32.xlu0 %v489, 32
    %v519 = vpop.permute.xlu0 %518
    %521 = vrot.lane.b32.xlu0 %v510, 64
    %v522 = vpop.permute.xlu0 %521
    %v524 = vsel %vm115, %v519, %v522
    %v525 = vld [vmem:[%s6] sm:$0xff]
    %v526 = vld [vmem:[%s6 + $0x8] sm:$0xff]
    %v527 = vld [vmem:[%s6 + $0x10] sm:$0xff]
    %v528 = vld [vmem:[%s6 + $0x18] sm:$0xff]
    %v529 = vld [vmem:[%s6 + $0x20] sm:$0xff]
    %v530 = vld [vmem:[%s6 + $0x28] sm:$0xff]
    %v531 = vld [vmem:[%s6 + $0x30] sm:$0xff]
    %v532 = vld [vmem:[%s6 + $0x38] sm:$0xff]
    %v533 = vld [vmem:[%s6 + $0x40] sm:$0xff]
    %v534 = vld [vmem:[%s6 + $0x48] sm:$0xff]
    %v535 = vld [vmem:[%s6 + $0x50] sm:$0xff]
    %v536 = vld [vmem:[%s6 + $0x58] sm:$0xff]
    %v537 = vld [vmem:[%s6 + $0x60] sm:$0xff]
    %v538 = vld [vmem:[%s6 + $0x68] sm:$0xff]
    %v539 = vld [vmem:[%s6 + $0x70] sm:$0xff]
    %v540 = vld [vmem:[%s6 + $0x78] sm:$0xff]
    %v542 = vsel %vm281, %v524, 0
    %544 = vmatprep.subr.mxu0 0.0
    %545 = vmatpush1.msra.mxu0 0.0
    %546 = vmatprep.subr.mxu0 0.0
    %547 = vmatpush1.msra.mxu0 0.0
    %548 = vmatprep.subr.mxu0 0.0
    %549 = vmatpush1.msra.mxu0 0.0
    %550 = vmatprep.subr.mxu0 0.0
    %551 = vmatpush1.msra.mxu0 0.0
    %552 = vmatprep.subr.mxu0 0.0
    %553 = vmatpush1.msra.mxu0 0.0
    %554 = vmatprep.subr.mxu0 0.0
    %555 = vmatpush1.msra.mxu0 0.0
    %556 = vmatprep.subr.mxu0 0.0
    %557 = vmatpush1.msra.mxu0 0.0
    %558 = vmatprep.subr.mxu0 0.0
    %559 = vmatpush1.msra.mxu0 0.0
    %560 = vmatprep.subr.mxu0 %v540
    %561 = vmatpush1.msra.mxu0 %v539
    %562 = vmatprep.subr.mxu0 %v538
    %563 = vmatpush1.msra.mxu0 %v537
    %564 = vmatprep.subr.mxu0 %v536
    %565 = vmatpush1.msra.mxu0 %v535
    %566 = vmatprep.subr.mxu0 %v534
    %567 = vmatpush1.msra.mxu0 %v533
    %568 = vmatprep.subr.mxu0 %v532
    %569 = vmatpush1.msra.mxu0 %v531
    %570 = vmatprep.subr.mxu0 %v530
    %571 = vmatpush1.msra.mxu0 %v529
    %572 = vmatprep.subr.mxu0 %v528
    %573 = vmatpush1.msra.mxu0 %v527
    %574 = vmatprep.subr.mxu0 %v526
    %575 = vmatpush1.msra.mxu0 %v525
    %576 = vmatprep.subr.mxu0 0.0
    %577 = vmatpush2.msra.mxu0 0.0
    %578 = vmatprep.subr.mxu0 0.0
    %579 = vmatpush2.msra.mxu0 0.0
    %580 = vmatprep.subr.mxu0 0.0
    %581 = vmatpush2.msra.mxu0 0.0
    %582 = vmatprep.subr.mxu0 0.0
    %583 = vmatpush2.msra.mxu0 0.0
    %584 = vmatprep.subr.mxu0 0.0
    %585 = vmatpush2.msra.mxu0 0.0
    %586 = vmatprep.subr.mxu0 0.0
    %587 = vmatpush2.msra.mxu0 0.0
    %588 = vmatprep.subr.mxu0 0.0
    %589 = vmatpush2.msra.mxu0 0.0
    %590 = vmatprep.subr.mxu0 0.0
    %591 = vmatpush2.msra.mxu0 0.0
    %592 = vmatprep.subr.mxu0 0.0
    %593 = vmatpush2.msra.mxu0 0.0
    %594 = vmatprep.subr.mxu0 0.0
    %595 = vmatpush2.msra.mxu0 0.0
    %596 = vmatprep.subr.mxu0 0.0
    %597 = vmatpush2.msra.mxu0 0.0
    %598 = vmatprep.subr.mxu0 0.0
    %599 = vmatpush2.msra.mxu0 0.0
    %600 = vmatprep.subr.mxu0 0.0
    %601 = vmatpush2.msra.mxu0 0.0
    %602 = vmatprep.subr.mxu0 0.0
    %603 = vmatpush2.msra.mxu0 0.0
    %604 = vmatprep.subr.mxu0 0.0
    %605 = vmatpush2.msra.mxu0 0.0
    %606 = vmatprep.subr.mxu0 0.0
    %607 = vmatpush2.msra.mxu0 0.0
    %608 = vmatprep.mubr.f32.mxu0 0.0
    %609 = vmatmul.mubr.f32.gmra.mxu0 %v542
    %v610 = vpop.f32.mrf.mxu0
    %v611 = vadd.f32 %v201, %v610
    %v612 = vpop.f32.mrf.mxu0
    %v613 = vadd.f32 %v203, %v612
    %614 = vdwg.mxu0
    %v615 = vmul.f32 %v611, %v250
    %v616 = vmul.f32 %v613, %v251
    %v617 = vtanh.pop %v615
    %v618 = vtanh.pop %v616
    %v619 = vmul.f32 %v617, %v250
    %v620 = vmul.f32 %v618, %v251
    %v621 = vadd.f32 %v619, %v252
    %v622 = vadd.f32 %v620, %v253
    %v623 = vmul.f32 %v621, %v483
    %625 = vrot.lane.b32.xlu0 %v621, 64
    %v626 = vpop.permute.xlu0 %625
    %v628 = vmul.f32 %v621, %v626
    %630 = vrot.lane.b32.xlu0 %v628, 32
    %v631 = vpop.permute.xlu0 %630
    %v633 = vadd.f32 %v623, %v631
    %v634 = vtanh.pop %v633
    %636 = vrot.lane.b32.xlu0 %v634, 64
    %v637 = vpop.permute.xlu0 %636
    %v639 = vmul.f32 %v621, %v637
    %v640 = vmul.f32 %v622, %v504
    %642 = vrot.lane.b32.xlu0 %v622, 64
    %v643 = vpop.permute.xlu0 %642
    %v645 = vmul.f32 %v622, %v643
    %647 = vrot.lane.b32.xlu0 %v645, 32
    %v648 = vpop.permute.xlu0 %647
    %v650 = vadd.f32 %v640, %v648
    %v651 = vtanh.pop %v650
    %653 = vrot.lane.b32.xlu0 %v651, 64
    %v654 = vpop.permute.xlu0 %653
    %v656 = vmul.f32 %v622, %v654
    %658 = vrot.lane.b32.xlu0 %v656, 32
    %v659 = vpop.permute.xlu0 %658
    %661 = vst.msk [vmem:[#allocation2 + $0x4] sm:$0xf] %vm515, %v659
    %663 = vrot.lane.b32.xlu0 %v639, 32
    %v664 = vpop.permute.xlu0 %663
    %666 = vrot.lane.b32.xlu0 %v656, 64
    %v667 = vpop.permute.xlu0 %666
    %v669 = vsel %vm115, %v664, %v667
    %v670 = vld [vmem:[%s6] sm:$0xff]
    %v671 = vld [vmem:[%s6 + $0x8] sm:$0xff]
    %v672 = vld [vmem:[%s6 + $0x10] sm:$0xff]
    %v673 = vld [vmem:[%s6 + $0x18] sm:$0xff]
    %v674 = vld [vmem:[%s6 + $0x20] sm:$0xff]
    %v675 = vld [vmem:[%s6 + $0x28] sm:$0xff]
    %v676 = vld [vmem:[%s6 + $0x30] sm:$0xff]
    %v677 = vld [vmem:[%s6 + $0x38] sm:$0xff]
    %v678 = vld [vmem:[%s6 + $0x40] sm:$0xff]
    %v679 = vld [vmem:[%s6 + $0x48] sm:$0xff]
    %v680 = vld [vmem:[%s6 + $0x50] sm:$0xff]
    %v681 = vld [vmem:[%s6 + $0x58] sm:$0xff]
    %v682 = vld [vmem:[%s6 + $0x60] sm:$0xff]
    %v683 = vld [vmem:[%s6 + $0x68] sm:$0xff]
    %v684 = vld [vmem:[%s6 + $0x70] sm:$0xff]
    %v685 = vld [vmem:[%s6 + $0x78] sm:$0xff]
    %v688 = vrot.slane %v201, 4
    %v689 = vrot.slane %v203, 4
    %v693 = vsel %vm281, %v669, 0
    %695 = vmatprep.subr.mxu0 0.0
    %696 = vmatpush1.msra.mxu0 0.0
    %697 = vmatprep.subr.mxu0 0.0
    %698 = vmatpush1.msra.mxu0 0.0
    %699 = vmatprep.subr.mxu0 0.0
    %700 = vmatpush1.msra.mxu0 0.0
    %701 = vmatprep.subr.mxu0 0.0
    %702 = vmatpush1.msra.mxu0 0.0
    %703 = vmatprep.subr.mxu0 0.0
    %704 = vmatpush1.msra.mxu0 0.0
    %705 = vmatprep.subr.mxu0 0.0
    %706 = vmatpush1.msra.mxu0 0.0
    %707 = vmatprep.subr.mxu0 0.0
    %708 = vmatpush1.msra.mxu0 0.0
    %709 = vmatprep.subr.mxu0 0.0
    %710 = vmatpush1.msra.mxu0 0.0
    %711 = vmatprep.subr.mxu0 %v685
    %712 = vmatpush1.msra.mxu0 %v684
    %713 = vmatprep.subr.mxu0 %v683
    %714 = vmatpush1.msra.mxu0 %v682
    %715 = vmatprep.subr.mxu0 %v681
    %716 = vmatpush1.msra.mxu0 %v680
    %717 = vmatprep.subr.mxu0 %v679
    %718 = vmatpush1.msra.mxu0 %v678
    %719 = vmatprep.subr.mxu0 %v677
    %720 = vmatpush1.msra.mxu0 %v676
    %721 = vmatprep.subr.mxu0 %v675
    %722 = vmatpush1.msra.mxu0 %v674
    %723 = vmatprep.subr.mxu0 %v673
    %724 = vmatpush1.msra.mxu0 %v672
    %725 = vmatprep.subr.mxu0 %v671
    %726 = vmatpush1.msra.mxu0 %v670
    %727 = vmatprep.subr.mxu0 0.0
    %728 = vmatpush2.msra.mxu0 0.0
    %729 = vmatprep.subr.mxu0 0.0
    %730 = vmatpush2.msra.mxu0 0.0
    %731 = vmatprep.subr.mxu0 0.0
    %732 = vmatpush2.msra.mxu0 0.0
    %733 = vmatprep.subr.mxu0 0.0
    %734 = vmatpush2.msra.mxu0 0.0
    %735 = vmatprep.subr.mxu0 0.0
    %736 = vmatpush2.msra.mxu0 0.0
    %737 = vmatprep.subr.mxu0 0.0
    %738 = vmatpush2.msra.mxu0 0.0
    %739 = vmatprep.subr.mxu0 0.0
    %740 = vmatpush2.msra.mxu0 0.0
    %741 = vmatprep.subr.mxu0 0.0
    %742 = vmatpush2.msra.mxu0 0.0
    %743 = vmatprep.subr.mxu0 0.0
    %744 = vmatpush2.msra.mxu0 0.0
    %745 = vmatprep.subr.mxu0 0.0
    %746 = vmatpush2.msra.mxu0 0.0
    %747 = vmatprep.subr.mxu0 0.0
    %748 = vmatpush2.msra.mxu0 0.0
    %749 = vmatprep.subr.mxu0 0.0
    %750 = vmatpush2.msra.mxu0 0.0
    %751 = vmatprep.subr.mxu0 0.0
    %752 = vmatpush2.msra.mxu0 0.0
    %753 = vmatprep.subr.mxu0 0.0
    %754 = vmatpush2.msra.mxu0 0.0
    %755 = vmatprep.subr.mxu0 0.0
    %756 = vmatpush2.msra.mxu0 0.0
    %757 = vmatprep.subr.mxu0 0.0
    %758 = vmatpush2.msra.mxu0 0.0
    %759 = vmatprep.mubr.f32.mxu0 0.0
    %760 = vmatmul.mubr.f32.gmra.mxu0 %v693
    %v761 = vpop.f32.mrf.mxu0
    %v762 = vadd.f32 %v688, %v761
    %v763 = vpop.f32.mrf.mxu0
    %v764 = vadd.f32 %v689, %v763
    %765 = vdwg.mxu0
    %v766 = vmul.f32 %v762, %v250
    %v767 = vmul.f32 %v764, %v251
    %v768 = vtanh.pop %v766
    %v769 = vtanh.pop %v767
    %v770 = vmul.f32 %v768, %v250
    %v771 = vmul.f32 %v769, %v251
    %v772 = vadd.f32 %v770, %v252
    %v773 = vadd.f32 %v771, %v253
    %v774 = vmul.f32 %v772, %v633
    %776 = vrot.lane.b32.xlu0 %v772, 64
    %v777 = vpop.permute.xlu0 %776
    %v779 = vmul.f32 %v772, %v777
    %781 = vrot.lane.b32.xlu0 %v779, 32
    %v782 = vpop.permute.xlu0 %781
    %v784 = vadd.f32 %v774, %v782
    %v785 = vtanh.pop %v784
    %787 = vrot.lane.b32.xlu0 %v785, 64
    %v788 = vpop.permute.xlu0 %787
    %v790 = vmul.f32 %v772, %v788
    %v791 = vmul.f32 %v773, %v650
    %793 = vrot.lane.b32.xlu0 %v773, 64
    %v794 = vpop.permute.xlu0 %793
    %v796 = vmul.f32 %v773, %v794
    %798 = vrot.lane.b32.xlu0 %v796, 32
    %v799 = vpop.permute.xlu0 %798
    %v801 = vadd.f32 %v791, %v799
    %v802 = vtanh.pop %v801
    %804 = vrot.lane.b32.xlu0 %v802, 64
    %v805 = vpop.permute.xlu0 %804
    %v807 = vmul.f32 %v773, %v805
    %809 = vrot.lane.b32.xlu0 %v807, 32
    %v810 = vpop.permute.xlu0 %809
    %812 = vst.msk [vmem:[#allocation2 + $0x8] sm:$0xf] %vm515, %v810
    %814 = vrot.lane.b32.xlu0 %v790, 32
    %v815 = vpop.permute.xlu0 %814
    %817 = vrot.lane.b32.xlu0 %v807, 64
    %v818 = vpop.permute.xlu0 %817
    %v820 = vsel %vm115, %v815, %v818
    %v821 = vld [vmem:[%s6] sm:$0xff]
    %v822 = vld [vmem:[%s6 + $0x8] sm:$0xff]
    %v823 = vld [vmem:[%s6 + $0x10] sm:$0xff]
    %v824 = vld [vmem:[%s6 + $0x18] sm:$0xff]
    %v825 = vld [vmem:[%s6 + $0x20] sm:$0xff]
    %v826 = vld [vmem:[%s6 + $0x28] sm:$0xff]
    %v827 = vld [vmem:[%s6 + $0x30] sm:$0xff]
    %v828 = vld [vmem:[%s6 + $0x38] sm:$0xff]
    %v829 = vld [vmem:[%s6 + $0x40] sm:$0xff]
    %v830 = vld [vmem:[%s6 + $0x48] sm:$0xff]
    %v831 = vld [vmem:[%s6 + $0x50] sm:$0xff]
    %v832 = vld [vmem:[%s6 + $0x58] sm:$0xff]
    %v833 = vld [vmem:[%s6 + $0x60] sm:$0xff]
    %v834 = vld [vmem:[%s6 + $0x68] sm:$0xff]
    %v835 = vld [vmem:[%s6 + $0x70] sm:$0xff]
    %v836 = vld [vmem:[%s6 + $0x78] sm:$0xff]
    %v838 = vsel %vm281, %v820, 0
    %840 = vmatprep.subr.mxu0 0.0
    %841 = vmatpush1.msra.mxu0 0.0
    %842 = vmatprep.subr.mxu0 0.0
    %843 = vmatpush1.msra.mxu0 0.0
    %844 = vmatprep.subr.mxu0 0.0
    %845 = vmatpush1.msra.mxu0 0.0
    %846 = vmatprep.subr.mxu0 0.0
    %847 = vmatpush1.msra.mxu0 0.0
    %848 = vmatprep.subr.mxu0 0.0
    %849 = vmatpush1.msra.mxu0 0.0
    %850 = vmatprep.subr.mxu0 0.0
    %851 = vmatpush1.msra.mxu0 0.0
    %852 = vmatprep.subr.mxu0 0.0
    %853 = vmatpush1.msra.mxu0 0.0
    %854 = vmatprep.subr.mxu0 0.0
    %855 = vmatpush1.msra.mxu0 0.0
    %856 = vmatprep.subr.mxu0 %v836
    %857 = vmatpush1.msra.mxu0 %v835
    %858 = vmatprep.subr.mxu0 %v834
    %859 = vmatpush1.msra.mxu0 %v833
    %860 = vmatprep.subr.mxu0 %v832
    %861 = vmatpush1.msra.mxu0 %v831
    %862 = vmatprep.subr.mxu0 %v830
    %863 = vmatpush1.msra.mxu0 %v829
    %864 = vmatprep.subr.mxu0 %v828
    %865 = vmatpush1.msra.mxu0 %v827
    %866 = vmatprep.subr.mxu0 %v826
    %867 = vmatpush1.msra.mxu0 %v825
    %868 = vmatprep.subr.mxu0 %v824
    %869 = vmatpush1.msra.mxu0 %v823
    %870 = vmatprep.subr.mxu0 %v822
    %871 = vmatpush1.msra.mxu0 %v821
    %872 = vmatprep.subr.mxu0 0.0
    %873 = vmatpush2.msra.mxu0 0.0
    %874 = vmatprep.subr.mxu0 0.0
    %875 = vmatpush2.msra.mxu0 0.0
    %876 = vmatprep.subr.mxu0 0.0
    %877 = vmatpush2.msra.mxu0 0.0
    %878 = vmatprep.subr.mxu0 0.0
    %879 = vmatpush2.msra.mxu0 0.0
    %880 = vmatprep.subr.mxu0 0.0
    %881 = vmatpush2.msra.mxu0 0.0
    %882 = vmatprep.subr.mxu0 0.0
    %883 = vmatpush2.msra.mxu0 0.0
    %884 = vmatprep.subr.mxu0 0.0
    %885 = vmatpush2.msra.mxu0 0.0
    %886 = vmatprep.subr.mxu0 0.0
    %887 = vmatpush2.msra.mxu0 0.0
    %888 = vmatprep.subr.mxu0 0.0
    %889 = vmatpush2.msra.mxu0 0.0
    %890 = vmatprep.subr.mxu0 0.0
    %891 = vmatpush2.msra.mxu0 0.0
    %892 = vmatprep.subr.mxu0 0.0
    %893 = vmatpush2.msra.mxu0 0.0
    %894 = vmatprep.subr.mxu0 0.0
    %895 = vmatpush2.msra.mxu0 0.0
    %896 = vmatprep.subr.mxu0 0.0
    %897 = vmatpush2.msra.mxu0 0.0
    %898 = vmatprep.subr.mxu0 0.0
    %899 = vmatpush2.msra.mxu0 0.0
    %900 = vmatprep.subr.mxu0 0.0
    %901 = vmatpush2.msra.mxu0 0.0
    %902 = vmatprep.subr.mxu0 0.0
    %903 = vmatpush2.msra.mxu0 0.0
    %904 = vmatprep.mubr.f32.mxu0 0.0
    %905 = vmatmul.mubr.f32.gmra.mxu0 %v838
    %v906 = vpop.f32.mrf.mxu0
    %v907 = vadd.f32 %v207, %v906
    %v908 = vpop.f32.mrf.mxu0
    %v909 = vadd.f32 %v209, %v908
    %910 = vdwg.mxu0
    %v911 = vmul.f32 %v907, %v250
    %v912 = vmul.f32 %v909, %v251
    %v913 = vtanh.pop %v911
    %v914 = vtanh.pop %v912
    %v915 = vmul.f32 %v913, %v250
    %v916 = vmul.f32 %v914, %v251
    %v917 = vadd.f32 %v915, %v252
    %v918 = vadd.f32 %v916, %v253
    %v919 = vmul.f32 %v917, %v784
    %921 = vrot.lane.b32.xlu0 %v917, 64
    %v922 = vpop.permute.xlu0 %921
    %v924 = vmul.f32 %v917, %v922
    %926 = vrot.lane.b32.xlu0 %v924, 32
    %v927 = vpop.permute.xlu0 %926
    %v929 = vadd.f32 %v919, %v927
    %v930 = vtanh.pop %v929
    %932 = vrot.lane.b32.xlu0 %v930, 64
    %v933 = vpop.permute.xlu0 %932
    %v935 = vmul.f32 %v917, %v933
    %v936 = vmul.f32 %v918, %v801
    %938 = vrot.lane.b32.xlu0 %v918, 64
    %v939 = vpop.permute.xlu0 %938
    %v941 = vmul.f32 %v918, %v939
    %943 = vrot.lane.b32.xlu0 %v941, 32
    %v944 = vpop.permute.xlu0 %943
    %v946 = vadd.f32 %v936, %v944
    %v947 = vtanh.pop %v946
    %949 = vrot.lane.b32.xlu0 %v947, 64
    %v950 = vpop.permute.xlu0 %949
    %v952 = vmul.f32 %v918, %v950
    %954 = vrot.lane.b32.xlu0 %v952, 32
    %v955 = vpop.permute.xlu0 %954
    %957 = vst.msk [vmem:[#allocation2 + $0xc] sm:$0xf] %vm515, %v955
    %959 = vrot.lane.b32.xlu0 %v935, 32
    %v960 = vpop.permute.xlu0 %959
    %962 = vrot.lane.b32.xlu0 %v952, 64
    %v963 = vpop.permute.xlu0 %962
    %v965 = vsel %vm115, %v960, %v963
    %v966 = vld [vmem:[%s6] sm:$0xff]
    %v967 = vld [vmem:[%s6 + $0x8] sm:$0xff]
    %v968 = vld [vmem:[%s6 + $0x10] sm:$0xff]
    %v969 = vld [vmem:[%s6 + $0x18] sm:$0xff]
    %v970 = vld [vmem:[%s6 + $0x20] sm:$0xff]
    %v971 = vld [vmem:[%s6 + $0x28] sm:$0xff]
    %v972 = vld [vmem:[%s6 + $0x30] sm:$0xff]
    %v973 = vld [vmem:[%s6 + $0x38] sm:$0xff]
    %v974 = vld [vmem:[%s6 + $0x40] sm:$0xff]
    %v975 = vld [vmem:[%s6 + $0x48] sm:$0xff]
    %v976 = vld [vmem:[%s6 + $0x50] sm:$0xff]
    %v977 = vld [vmem:[%s6 + $0x58] sm:$0xff]
    %v978 = vld [vmem:[%s6 + $0x60] sm:$0xff]
    %v979 = vld [vmem:[%s6 + $0x68] sm:$0xff]
    %v980 = vld [vmem:[%s6 + $0x70] sm:$0xff]
    %v981 = vld [vmem:[%s6 + $0x78] sm:$0xff]
    %v984 = vrot.slane %v207, 4
    %v985 = vrot.slane %v209, 4
    %v989 = vsel %vm281, %v965, 0
    %991 = vmatprep.subr.mxu0 0.0
    %992 = vmatpush1.msra.mxu0 0.0
    %993 = vmatprep.subr.mxu0 0.0
    %994 = vmatpush1.msra.mxu0 0.0
    %995 = vmatprep.subr.mxu0 0.0
    %996 = vmatpush1.msra.mxu0 0.0
    %997 = vmatprep.subr.mxu0 0.0
    %998 = vmatpush1.msra.mxu0 0.0
    %999 = vmatprep.subr.mxu0 0.0
    %1000 = vmatpush1.msra.mxu0 0.0
    %1001 = vmatprep.subr.mxu0 0.0
    %1002 = vmatpush1.msra.mxu0 0.0
    %1003 = vmatprep.subr.mxu0 0.0
    %1004 = vmatpush1.msra.mxu0 0.0
    %1005 = vmatprep.subr.mxu0 0.0
    %1006 = vmatpush1.msra.mxu0 0.0
    %1007 = vmatprep.subr.mxu0 %v981
    %1008 = vmatpush1.msra.mxu0 %v980
    %1009 = vmatprep.subr.mxu0 %v979
    %1010 = vmatpush1.msra.mxu0 %v978
    %1011 = vmatprep.subr.mxu0 %v977
    %1012 = vmatpush1.msra.mxu0 %v976
    %1013 = vmatprep.subr.mxu0 %v975
    %1014 = vmatpush1.msra.mxu0 %v974
    %1015 = vmatprep.subr.mxu0 %v973
    %1016 = vmatpush1.msra.mxu0 %v972
    %1017 = vmatprep.subr.mxu0 %v971
    %1018 = vmatpush1.msra.mxu0 %v970
    %1019 = vmatprep.subr.mxu0 %v969
    %1020 = vmatpush1.msra.mxu0 %v968
    %1021 = vmatprep.subr.mxu0 %v967
    %1022 = vmatpush1.msra.mxu0 %v966
    %1023 = vmatprep.subr.mxu0 0.0
    %1024 = vmatpush2.msra.mxu0 0.0
    %1025 = vmatprep.subr.mxu0 0.0
    %1026 = vmatpush2.msra.mxu0 0.0
    %1027 = vmatprep.subr.mxu0 0.0
    %1028 = vmatpush2.msra.mxu0 0.0
    %1029 = vmatprep.subr.mxu0 0.0
    %1030 = vmatpush2.msra.mxu0 0.0
    %1031 = vmatprep.subr.mxu0 0.0
    %1032 = vmatpush2.msra.mxu0 0.0
    %1033 = vmatprep.subr.mxu0 0.0
    %1034 = vmatpush2.msra.mxu0 0.0
    %1035 = vmatprep.subr.mxu0 0.0
    %1036 = vmatpush2.msra.mxu0 0.0
    %1037 = vmatprep.subr.mxu0 0.0
    %1038 = vmatpush2.msra.mxu0 0.0
    %1039 = vmatprep.subr.mxu0 0.0
    %1040 = vmatpush2.msra.mxu0 0.0
    %1041 = vmatprep.subr.mxu0 0.0
    %1042 = vmatpush2.msra.mxu0 0.0
    %1043 = vmatprep.subr.mxu0 0.0
    %1044 = vmatpush2.msra.mxu0 0.0
    %1045 = vmatprep.subr.mxu0 0.0
    %1046 = vmatpush2.msra.mxu0 0.0
    %1047 = vmatprep.subr.mxu0 0.0
    %1048 = vmatpush2.msra.mxu0 0.0
    %1049 = vmatprep.subr.mxu0 0.0
    %1050 = vmatpush2.msra.mxu0 0.0
    %1051 = vmatprep.subr.mxu0 0.0
    %1052 = vmatpush2.msra.mxu0 0.0
    %1053 = vmatprep.subr.mxu0 0.0
    %1054 = vmatpush2.msra.mxu0 0.0
    %1055 = vmatprep.mubr.f32.mxu0 0.0
    %1056 = vmatmul.mubr.f32.gmra.mxu0 %v989
    %v1057 = vpop.f32.mrf.mxu0
    %v1058 = vadd.f32 %v984, %v1057
    %v1059 = vpop.f32.mrf.mxu0
    %v1060 = vadd.f32 %v985, %v1059
    %1061 = vdwg.mxu0
    %v1062 = vmul.f32 %v1058, %v250
    %v1063 = vmul.f32 %v1060, %v251
    %v1064 = vtanh.pop %v1062
    %v1065 = vtanh.pop %v1063
    %v1066 = vmul.f32 %v1064, %v250
    %v1067 = vmul.f32 %v1065, %v251
    %v1068 = vadd.f32 %v1066, %v252
    %v1069 = vadd.f32 %v1067, %v253
    %v1070 = vmul.f32 %v1068, %v929
    %1072 = vrot.lane.b32.xlu0 %v1068, 64
    %v1073 = vpop.permute.xlu0 %1072
    %v1075 = vmul.f32 %v1068, %v1073
    %1077 = vrot.lane.b32.xlu0 %v1075, 32
    %v1078 = vpop.permute.xlu0 %1077
    %v1080 = vadd.f32 %v1070, %v1078
    %v1081 = vtanh.pop %v1080
    %1083 = vrot.lane.b32.xlu0 %v1081, 64
    %v1084 = vpop.permute.xlu0 %1083
    %v1086 = vmul.f32 %v1068, %v1084
    %v1087 = vmul.f32 %v1069, %v946
    %1089 = vrot.lane.b32.xlu0 %v1069, 64
    %v1090 = vpop.permute.xlu0 %1089
    %v1092 = vmul.f32 %v1069, %v1090
    %1094 = vrot.lane.b32.xlu0 %v1092, 32
    %v1095 = vpop.permute.xlu0 %1094
    %v1097 = vadd.f32 %v1087, %v1095
    %v1098 = vtanh.pop %v1097
    %1100 = vrot.lane.b32.xlu0 %v1098, 64
    %v1101 = vpop.permute.xlu0 %1100
    %v1103 = vmul.f32 %v1069, %v1101
    %1105 = vrot.lane.b32.xlu0 %v1103, 32
    %v1106 = vpop.permute.xlu0 %1105
    %1108 = vst.msk [vmem:[#allocation2 + $0x10] sm:$0xf] %vm515, %v1106
    %1110 = vrot.lane.b32.xlu0 %v1086, 32
    %v1111 = vpop.permute.xlu0 %1110
    %1113 = vrot.lane.b32.xlu0 %v1103, 64
    %v1114 = vpop.permute.xlu0 %1113
    %v1116 = vsel %vm115, %v1111, %v1114
    %v1117 = vld [vmem:[%s6] sm:$0xff]
    %v1118 = vld [vmem:[%s6 + $0x8] sm:$0xff]
    %v1119 = vld [vmem:[%s6 + $0x10] sm:$0xff]
    %v1120 = vld [vmem:[%s6 + $0x18] sm:$0xff]
    %v1121 = vld [vmem:[%s6 + $0x20] sm:$0xff]
    %v1122 = vld [vmem:[%s6 + $0x28] sm:$0xff]
    %v1123 = vld [vmem:[%s6 + $0x30] sm:$0xff]
    %v1124 = vld [vmem:[%s6 + $0x38] sm:$0xff]
    %v1125 = vld [vmem:[%s6 + $0x40] sm:$0xff]
    %v1126 = vld [vmem:[%s6 + $0x48] sm:$0xff]
    %v1127 = vld [vmem:[%s6 + $0x50] sm:$0xff]
    %v1128 = vld [vmem:[%s6 + $0x58] sm:$0xff]
    %v1129 = vld [vmem:[%s6 + $0x60] sm:$0xff]
    %v1130 = vld [vmem:[%s6 + $0x68] sm:$0xff]
    %v1131 = vld [vmem:[%s6 + $0x70] sm:$0xff]
    %v1132 = vld [vmem:[%s6 + $0x78] sm:$0xff]
    %v1134 = vsel %vm281, %v1116, 0
    %1136 = vmatprep.subr.mxu0 0.0
    %1137 = vmatpush1.msra.mxu0 0.0
    %1138 = vmatprep.subr.mxu0 0.0
    %1139 = vmatpush1.msra.mxu0 0.0
    %1140 = vmatprep.subr.mxu0 0.0
    %1141 = vmatpush1.msra.mxu0 0.0
    %1142 = vmatprep.subr.mxu0 0.0
    %1143 = vmatpush1.msra.mxu0 0.0
    %1144 = vmatprep.subr.mxu0 0.0
    %1145 = vmatpush1.msra.mxu0 0.0
    %1146 = vmatprep.subr.mxu0 0.0
    %1147 = vmatpush1.msra.mxu0 0.0
    %1148 = vmatprep.subr.mxu0 0.0
    %1149 = vmatpush1.msra.mxu0 0.0
    %1150 = vmatprep.subr.mxu0 0.0
    %1151 = vmatpush1.msra.mxu0 0.0
    %1152 = vmatprep.subr.mxu0 %v1132
    %1153 = vmatpush1.msra.mxu0 %v1131
    %1154 = vmatprep.subr.mxu0 %v1130
    %1155 = vmatpush1.msra.mxu0 %v1129
    %1156 = vmatprep.subr.mxu0 %v1128
    %1157 = vmatpush1.msra.mxu0 %v1127
    %1158 = vmatprep.subr.mxu0 %v1126
    %1159 = vmatpush1.msra.mxu0 %v1125
    %1160 = vmatprep.subr.mxu0 %v1124
    %1161 = vmatpush1.msra.mxu0 %v1123
    %1162 = vmatprep.subr.mxu0 %v1122
    %1163 = vmatpush1.msra.mxu0 %v1121
    %1164 = vmatprep.subr.mxu0 %v1120
    %1165 = vmatpush1.msra.mxu0 %v1119
    %1166 = vmatprep.subr.mxu0 %v1118
    %1167 = vmatpush1.msra.mxu0 %v1117
    %1168 = vmatprep.subr.mxu0 0.0
    %1169 = vmatpush2.msra.mxu0 0.0
    %1170 = vmatprep.subr.mxu0 0.0
    %1171 = vmatpush2.msra.mxu0 0.0
    %1172 = vmatprep.subr.mxu0 0.0
    %1173 = vmatpush2.msra.mxu0 0.0
    %1174 = vmatprep.subr.mxu0 0.0
    %1175 = vmatpush2.msra.mxu0 0.0
    %1176 = vmatprep.subr.mxu0 0.0
    %1177 = vmatpush2.msra.mxu0 0.0
    %1178 = vmatprep.subr.mxu0 0.0
    %1179 = vmatpush2.msra.mxu0 0.0
    %1180 = vmatprep.subr.mxu0 0.0
    %1181 = vmatpush2.msra.mxu0 0.0
    %1182 = vmatprep.subr.mxu0 0.0
    %1183 = vmatpush2.msra.mxu0 0.0
    %1184 = vmatprep.subr.mxu0 0.0
    %1185 = vmatpush2.msra.mxu0 0.0
    %1186 = vmatprep.subr.mxu0 0.0
    %1187 = vmatpush2.msra.mxu0 0.0
    %1188 = vmatprep.subr.mxu0 0.0
    %1189 = vmatpush2.msra.mxu0 0.0
    %1190 = vmatprep.subr.mxu0 0.0
    %1191 = vmatpush2.msra.mxu0 0.0
    %1192 = vmatprep.subr.mxu0 0.0
    %1193 = vmatpush2.msra.mxu0 0.0
    %1194 = vmatprep.subr.mxu0 0.0
    %1195 = vmatpush2.msra.mxu0 0.0
    %1196 = vmatprep.subr.mxu0 0.0
    %1197 = vmatpush2.msra.mxu0 0.0
    %1198 = vmatprep.subr.mxu0 0.0
    %1199 = vmatpush2.msra.mxu0 0.0
    %1200 = vmatprep.mubr.f32.mxu0 0.0
    %1201 = vmatmul.mubr.f32.gmra.mxu0 %v1134
    %v1202 = vpop.f32.mrf.mxu0
    %v1203 = vadd.f32 %v213, %v1202
    %v1204 = vpop.f32.mrf.mxu0
    %v1205 = vadd.f32 %v215, %v1204
    %1206 = vdwg.mxu0
    %v1207 = vmul.f32 %v1203, %v250
    %v1208 = vmul.f32 %v1205, %v251
    %v1209 = vtanh.pop %v1207
    %v1210 = vtanh.pop %v1208
    %v1211 = vmul.f32 %v1209, %v250
    %v1212 = vmul.f32 %v1210, %v251
    %v1213 = vadd.f32 %v1211, %v252
    %v1214 = vadd.f32 %v1212, %v253
    %v1215 = vmul.f32 %v1213, %v1080
    %1217 = vrot.lane.b32.xlu0 %v1213, 64
    %v1218 = vpop.permute.xlu0 %1217
    %v1220 = vmul.f32 %v1213, %v1218
    %1222 = vrot.lane.b32.xlu0 %v1220, 32
    %v1223 = vpop.permute.xlu0 %1222
    %v1225 = vadd.f32 %v1215, %v1223
    %v1226 = vtanh.pop %v1225
    %1228 = vrot.lane.b32.xlu0 %v1226, 64
    %v1229 = vpop.permute.xlu0 %1228
    %v1231 = vmul.f32 %v1213, %v1229
    %v1232 = vmul.f32 %v1214, %v1097
    %1234 = vrot.lane.b32.xlu0 %v1214, 64
    %v1235 = vpop.permute.xlu0 %1234
    %v1237 = vmul.f32 %v1214, %v1235
    %1239 = vrot.lane.b32.xlu0 %v1237, 32
    %v1240 = vpop.permute.xlu0 %1239
    %v1242 = vadd.f32 %v1232, %v1240
    %v1243 = vtanh.pop %v1242
    %1245 = vrot.lane.b32.xlu0 %v1243, 64
    %v1246 = vpop.permute.xlu0 %1245
    %v1248 = vmul.f32 %v1214, %v1246
    %1250 = vrot.lane.b32.xlu0 %v1248, 32
    %v1251 = vpop.permute.xlu0 %1250
    %1253 = vst.msk [vmem:[#allocation2 + $0x14] sm:$0xf] %vm515, %v1251
    %1255 = vrot.lane.b32.xlu0 %v1231, 32
    %v1256 = vpop.permute.xlu0 %1255
    %1258 = vrot.lane.b32.xlu0 %v1248, 64
    %v1259 = vpop.permute.xlu0 %1258
    %v1261 = vsel %vm115, %v1256, %v1259
    %v1262 = vld [vmem:[%s6] sm:$0xff]
    %v1263 = vld [vmem:[%s6 + $0x8] sm:$0xff]
    %v1264 = vld [vmem:[%s6 + $0x10] sm:$0xff]
    %v1265 = vld [vmem:[%s6 + $0x18] sm:$0xff]
    %v1266 = vld [vmem:[%s6 + $0x20] sm:$0xff]
    %v1267 = vld [vmem:[%s6 + $0x28] sm:$0xff]
    %v1268 = vld [vmem:[%s6 + $0x30] sm:$0xff]
    %v1269 = vld [vmem:[%s6 + $0x38] sm:$0xff]
    %v1270 = vld [vmem:[%s6 + $0x40] sm:$0xff]
    %v1271 = vld [vmem:[%s6 + $0x48] sm:$0xff]
    %v1272 = vld [vmem:[%s6 + $0x50] sm:$0xff]
    %v1273 = vld [vmem:[%s6 + $0x58] sm:$0xff]
    %v1274 = vld [vmem:[%s6 + $0x60] sm:$0xff]
    %v1275 = vld [vmem:[%s6 + $0x68] sm:$0xff]
    %v1276 = vld [vmem:[%s6 + $0x70] sm:$0xff]
    %v1277 = vld [vmem:[%s6 + $0x78] sm:$0xff]
    %v1280 = vrot.slane %v213, 4
    %v1281 = vrot.slane %v215, 4
    %v1285 = vsel %vm281, %v1261, 0
    %1287 = vmatprep.subr.mxu0 0.0
    %1288 = vmatpush1.msra.mxu0 0.0
    %1289 = vmatprep.subr.mxu0 0.0
    %1290 = vmatpush1.msra.mxu0 0.0
    %1291 = vmatprep.subr.mxu0 0.0
    %1292 = vmatpush1.msra.mxu0 0.0
    %1293 = vmatprep.subr.mxu0 0.0
    %1294 = vmatpush1.msra.mxu0 0.0
    %1295 = vmatprep.subr.mxu0 0.0
    %1296 = vmatpush1.msra.mxu0 0.0
    %1297 = vmatprep.subr.mxu0 0.0
    %1298 = vmatpush1.msra.mxu0 0.0
    %1299 = vmatprep.subr.mxu0 0.0
    %1300 = vmatpush1.msra.mxu0 0.0
    %1301 = vmatprep.subr.mxu0 0.0
    %1302 = vmatpush1.msra.mxu0 0.0
    %1303 = vmatprep.subr.mxu0 %v1277
    %1304 = vmatpush1.msra.mxu0 %v1276
    %1305 = vmatprep.subr.mxu0 %v1275
    %1306 = vmatpush1.msra.mxu0 %v1274
    %1307 = vmatprep.subr.mxu0 %v1273
    %1308 = vmatpush1.msra.mxu0 %v1272
    %1309 = vmatprep.subr.mxu0 %v1271
    %1310 = vmatpush1.msra.mxu0 %v1270
    %1311 = vmatprep.subr.mxu0 %v1269
    %1312 = vmatpush1.msra.mxu0 %v1268
    %1313 = vmatprep.subr.mxu0 %v1267
    %1314 = vmatpush1.msra.mxu0 %v1266
    %1315 = vmatprep.subr.mxu0 %v1265
    %1316 = vmatpush1.msra.mxu0 %v1264
    %1317 = vmatprep.subr.mxu0 %v1263
    %1318 = vmatpush1.msra.mxu0 %v1262
    %1319 = vmatprep.subr.mxu0 0.0
    %1320 = vmatpush2.msra.mxu0 0.0
    %1321 = vmatprep.subr.mxu0 0.0
    %1322 = vmatpush2.msra.mxu0 0.0
    %1323 = vmatprep.subr.mxu0 0.0
    %1324 = vmatpush2.msra.mxu0 0.0
    %1325 = vmatprep.subr.mxu0 0.0
    %1326 = vmatpush2.msra.mxu0 0.0
    %1327 = vmatprep.subr.mxu0 0.0
    %1328 = vmatpush2.msra.mxu0 0.0
    %1329 = vmatprep.subr.mxu0 0.0
    %1330 = vmatpush2.msra.mxu0 0.0
    %1331 = vmatprep.subr.mxu0 0.0
    %1332 = vmatpush2.msra.mxu0 0.0
    %1333 = vmatprep.subr.mxu0 0.0
    %1334 = vmatpush2.msra.mxu0 0.0
    %1335 = vmatprep.subr.mxu0 0.0
    %1336 = vmatpush2.msra.mxu0 0.0
    %1337 = vmatprep.subr.mxu0 0.0
    %1338 = vmatpush2.msra.mxu0 0.0
    %1339 = vmatprep.subr.mxu0 0.0
    %1340 = vmatpush2.msra.mxu0 0.0
    %1341 = vmatprep.subr.mxu0 0.0
    %1342 = vmatpush2.msra.mxu0 0.0
    %1343 = vmatprep.subr.mxu0 0.0
    %1344 = vmatpush2.msra.mxu0 0.0
    %1345 = vmatprep.subr.mxu0 0.0
    %1346 = vmatpush2.msra.mxu0 0.0
    %1347 = vmatprep.subr.mxu0 0.0
    %1348 = vmatpush2.msra.mxu0 0.0
    %1349 = vmatprep.subr.mxu0 0.0
    %1350 = vmatpush2.msra.mxu0 0.0
    %1351 = vmatprep.mubr.f32.mxu0 0.0
    %1352 = vmatmul.mubr.f32.gmra.mxu0 %v1285
    %v1353 = vpop.f32.mrf.mxu0
    %v1354 = vadd.f32 %v1280, %v1353
    %v1355 = vpop.f32.mrf.mxu0
    %v1356 = vadd.f32 %v1281, %v1355
    %1357 = vdwg.mxu0
    %v1358 = vmul.f32 %v1354, %v250
    %v1359 = vmul.f32 %v1356, %v251
    %v1360 = vtanh.pop %v1358
    %v1361 = vtanh.pop %v1359
    %v1362 = vmul.f32 %v1360, %v250
    %v1363 = vmul.f32 %v1361, %v251
    %v1364 = vadd.f32 %v1362, %v252
    %v1365 = vadd.f32 %v1363, %v253
    %v1366 = vmul.f32 %v1364, %v1225
    %1368 = vrot.lane.b32.xlu0 %v1364, 64
    %v1369 = vpop.permute.xlu0 %1368
    %v1371 = vmul.f32 %v1364, %v1369
    %1373 = vrot.lane.b32.xlu0 %v1371, 32
    %v1374 = vpop.permute.xlu0 %1373
    %v1376 = vadd.f32 %v1366, %v1374
    %v1377 = vtanh.pop %v1376
    %1379 = vrot.lane.b32.xlu0 %v1377, 64
    %v1380 = vpop.permute.xlu0 %1379
    %v1382 = vmul.f32 %v1364, %v1380
    %v1383 = vmul.f32 %v1365, %v1242
    %1385 = vrot.lane.b32.xlu0 %v1365, 64
    %v1386 = vpop.permute.xlu0 %1385
    %v1388 = vmul.f32 %v1365, %v1386
    %1390 = vrot.lane.b32.xlu0 %v1388, 32
    %v1391 = vpop.permute.xlu0 %1390
    %v1393 = vadd.f32 %v1383, %v1391
    %v1394 = vtanh.pop %v1393
    %1396 = vrot.lane.b32.xlu0 %v1394, 64
    %v1397 = vpop.permute.xlu0 %1396
    %v1399 = vmul.f32 %v1365, %v1397
    %1401 = vrot.lane.b32.xlu0 %v1399, 32
    %v1402 = vpop.permute.xlu0 %1401
    %1404 = vst.msk [vmem:[#allocation2 + $0x18] sm:$0xf] %vm515, %v1402
    %1406 = vrot.lane.b32.xlu0 %v1382, 32
    %v1407 = vpop.permute.xlu0 %1406
    %1409 = vrot.lane.b32.xlu0 %v1399, 64
    %v1410 = vpop.permute.xlu0 %1409
    %v1412 = vsel %vm115, %v1407, %v1410
    %v1413 = vld [vmem:[%s6] sm:$0xff]
    %v1414 = vld [vmem:[%s6 + $0x8] sm:$0xff]
    %v1415 = vld [vmem:[%s6 + $0x10] sm:$0xff]
    %v1416 = vld [vmem:[%s6 + $0x18] sm:$0xff]
    %v1417 = vld [vmem:[%s6 + $0x20] sm:$0xff]
    %v1418 = vld [vmem:[%s6 + $0x28] sm:$0xff]
    %v1419 = vld [vmem:[%s6 + $0x30] sm:$0xff]
    %v1420 = vld [vmem:[%s6 + $0x38] sm:$0xff]
    %v1421 = vld [vmem:[%s6 + $0x40] sm:$0xff]
    %v1422 = vld [vmem:[%s6 + $0x48] sm:$0xff]
    %v1423 = vld [vmem:[%s6 + $0x50] sm:$0xff]
    %v1424 = vld [vmem:[%s6 + $0x58] sm:$0xff]
    %v1425 = vld [vmem:[%s6 + $0x60] sm:$0xff]
    %v1426 = vld [vmem:[%s6 + $0x68] sm:$0xff]
    %v1427 = vld [vmem:[%s6 + $0x70] sm:$0xff]
    %v1428 = vld [vmem:[%s6 + $0x78] sm:$0xff]
    %v1430 = vsel %vm281, %v1412, 0
    %1432 = vmatprep.subr.mxu0 0.0
    %1433 = vmatpush1.msra.mxu0 0.0
    %1434 = vmatprep.subr.mxu0 0.0
    %1435 = vmatpush1.msra.mxu0 0.0
    %1436 = vmatprep.subr.mxu0 0.0
    %1437 = vmatpush1.msra.mxu0 0.0
    %1438 = vmatprep.subr.mxu0 0.0
    %1439 = vmatpush1.msra.mxu0 0.0
    %1440 = vmatprep.subr.mxu0 0.0
    %1441 = vmatpush1.msra.mxu0 0.0
    %1442 = vmatprep.subr.mxu0 0.0
    %1443 = vmatpush1.msra.mxu0 0.0
    %1444 = vmatprep.subr.mxu0 0.0
    %1445 = vmatpush1.msra.mxu0 0.0
    %1446 = vmatprep.subr.mxu0 0.0
    %1447 = vmatpush1.msra.mxu0 0.0
    %1448 = vmatprep.subr.mxu0 %v1428
    %1449 = vmatpush1.msra.mxu0 %v1427
    %1450 = vmatprep.subr.mxu0 %v1426
    %1451 = vmatpush1.msra.mxu0 %v1425
    %1452 = vmatprep.subr.mxu0 %v1424
    %1453 = vmatpush1.msra.mxu0 %v1423
    %1454 = vmatprep.subr.mxu0 %v1422
    %1455 = vmatpush1.msra.mxu0 %v1421
    %1456 = vmatprep.subr.mxu0 %v1420
    %1457 = vmatpush1.msra.mxu0 %v1419
    %1458 = vmatprep.subr.mxu0 %v1418
    %1459 = vmatpush1.msra.mxu0 %v1417
    %1460 = vmatprep.subr.mxu0 %v1416
    %1461 = vmatpush1.msra.mxu0 %v1415
    %1462 = vmatprep.subr.mxu0 %v1414
    %1463 = vmatpush1.msra.mxu0 %v1413
    %1464 = vmatprep.subr.mxu0 0.0
    %1465 = vmatpush2.msra.mxu0 0.0
    %1466 = vmatprep.subr.mxu0 0.0
    %1467 = vmatpush2.msra.mxu0 0.0
    %1468 = vmatprep.subr.mxu0 0.0
    %1469 = vmatpush2.msra.mxu0 0.0
    %1470 = vmatprep.subr.mxu0 0.0
    %1471 = vmatpush2.msra.mxu0 0.0
    %1472 = vmatprep.subr.mxu0 0.0
    %1473 = vmatpush2.msra.mxu0 0.0
    %1474 = vmatprep.subr.mxu0 0.0
    %1475 = vmatpush2.msra.mxu0 0.0
    %1476 = vmatprep.subr.mxu0 0.0
    %1477 = vmatpush2.msra.mxu0 0.0
    %1478 = vmatprep.subr.mxu0 0.0
    %1479 = vmatpush2.msra.mxu0 0.0
    %1480 = vmatprep.subr.mxu0 0.0
    %1481 = vmatpush2.msra.mxu0 0.0
    %1482 = vmatprep.subr.mxu0 0.0
    %1483 = vmatpush2.msra.mxu0 0.0
    %1484 = vmatprep.subr.mxu0 0.0
    %1485 = vmatpush2.msra.mxu0 0.0
    %1486 = vmatprep.subr.mxu0 0.0
    %1487 = vmatpush2.msra.mxu0 0.0
    %1488 = vmatprep.subr.mxu0 0.0
    %1489 = vmatpush2.msra.mxu0 0.0
    %1490 = vmatprep.subr.mxu0 0.0
    %1491 = vmatpush2.msra.mxu0 0.0
    %1492 = vmatprep.subr.mxu0 0.0
    %1493 = vmatpush2.msra.mxu0 0.0
    %1494 = vmatprep.subr.mxu0 0.0
    %1495 = vmatpush2.msra.mxu0 0.0
    %1496 = vmatprep.mubr.f32.mxu0 0.0
    %1497 = vmatmul.mubr.f32.gmra.mxu0 %v1430
    %v1498 = vpop.f32.mrf.mxu0
    %v1499 = vpop.f32.mrf.mxu0
    %v1500 = vadd.f32 %v1281, %v1499
    %1501 = vdwg.mxu0
    %v1502 = vmul.f32 %v1500, %v251
    %v1503 = vtanh.pop %v1502
    %v1504 = vmul.f32 %v1503, %v251
    %v1505 = vadd.f32 %v1504, %v253
    %v1506 = vmul.f32 %v1505, %v1393
    %1508 = vrot.lane.b32.xlu0 %v1505, 64
    %v1509 = vpop.permute.xlu0 %1508
    %v1511 = vmul.f32 %v1505, %v1509
    %1513 = vrot.lane.b32.xlu0 %v1511, 32
    %v1514 = vpop.permute.xlu0 %1513
    %v1516 = vadd.f32 %v1506, %v1514
    %v1517 = vtanh.pop %v1516
    %1519 = vrot.lane.b32.xlu0 %v1517, 64
    %v1520 = vpop.permute.xlu0 %1519
    %v1522 = vmul.f32 %v1505, %v1520
    %1524 = vrot.lane.b32.xlu0 %v1522, 32
    %v1525 = vpop.permute.xlu0 %1524
    %1527 = vst.msk [vmem:[#allocation2 + $0x1c] sm:$0xf] %vm515, %v1525
    %1528 = vst.msk [vmem:[#allocation11] sm:$0xf] %vm515, %v1407
    %1530 = vrot.lane.b32.xlu0 %v1376, 96
    %v1531 = vpop.permute.xlu0 %1530
    %1533 = vst.msk [vmem:[#allocation12] sm:$0xf] %vm515, %v1531
    %s1534 = scalar_lea.vmem [#allocation11], 4
    %1535 = vst.msk [vmem:[%s1534] sm:$0xf] %vm515, %v1525
    %1537 = vrot.lane.b32.xlu0 %v1516, 96
    %v1538 = vpop.permute.xlu0 %1537
    %s1540 = scalar_lea.vmem [#allocation12], 4
    %1541 = vst.msk [vmem:[%s1540] sm:$0xf] %vm515, %v1538
    %v1542 = vld [vmem:[#allocation2] sm:$0xff]
    %v1543 = vld [vmem:[#allocation2 + $0x8] sm:$0xff]
    %v1544 = vld [vmem:[#allocation2 + $0x10] sm:$0xff]
    %v1545 = vld [vmem:[#allocation2 + $0x18] sm:$0xff]
    %v1546 = vld [vmem:[#allocation9] sm:$0xff]
    %v1547 = vld [vmem:[#allocation9 + $0x8] sm:$0xff]
    %v1548 = vld [vmem:[#allocation9 + $0x10] sm:$0xff]
    %v1549 = vld [vmem:[#allocation9 + $0x18] sm:$0xff]
    %v1550 = vld [vmem:[%s8] sm:$0x1]
    %v1552 = vlaneseq
    %v1553 = vshrl.u32 %v1552, 7
    %v1554 = vsub.s32 0, %v1553
    %v1555 = vrot.slane %v1550, %v1554
    %v1558 = vsel %vm115, %v1542, 0
    %v1561 = vsel %vm115, %v1543, 0
    %v1564 = vsel %vm115, %v1544, 0
    %v1567 = vsel %vm115, %v1545, 0
    %1569 = vmatprep.subr.mxu0 0.0
    %1570 = vmatpush1.msra.mxu0 0.0
    %1571 = vmatprep.subr.mxu0 0.0
    %1572 = vmatpush1.msra.mxu0 0.0
    %1573 = vmatprep.subr.mxu0 0.0
    %1574 = vmatpush1.msra.mxu0 0.0
    %1575 = vmatprep.subr.mxu0 0.0
    %1576 = vmatpush1.msra.mxu0 0.0
    %1577 = vmatprep.subr.mxu0 0.0
    %1578 = vmatpush1.msra.mxu0 0.0
    %1579 = vmatprep.subr.mxu0 0.0
    %1580 = vmatpush1.msra.mxu0 0.0
    %1581 = vmatprep.subr.mxu0 0.0
    %1582 = vmatpush1.msra.mxu0 0.0
    %1583 = vmatprep.subr.mxu0 0.0
    %1584 = vmatpush1.msra.mxu0 0.0
    %1585 = vmatprep.subr.mxu0 0.0
    %1586 = vmatpush1.msra.mxu0 0.0
    %1587 = vmatprep.subr.mxu0 0.0
    %1588 = vmatpush1.msra.mxu0 0.0
    %1589 = vmatprep.subr.mxu0 0.0
    %1590 = vmatpush1.msra.mxu0 0.0
    %1591 = vmatprep.subr.mxu0 0.0
    %1592 = vmatpush1.msra.mxu0 0.0
    %1593 = vmatprep.subr.mxu0 0.0
    %1594 = vmatpush1.msra.mxu0 %v1549
    %1595 = vmatprep.subr.mxu0 0.0
    %1596 = vmatpush1.msra.mxu0 %v1548
    %1597 = vmatprep.subr.mxu0 0.0
    %1598 = vmatpush1.msra.mxu0 %v1547
    %1599 = vmatprep.subr.mxu0 0.0
    %1600 = vmatpush1.msra.mxu0 %v1546
    %1601 = vmatprep.subr.mxu0 0.0
    %1602 = vmatpush2.msra.mxu0 0.0
    %1603 = vmatprep.subr.mxu0 0.0
    %1604 = vmatpush2.msra.mxu0 0.0
    %1605 = vmatprep.subr.mxu0 0.0
    %1606 = vmatpush2.msra.mxu0 0.0
    %1607 = vmatprep.subr.mxu0 0.0
    %1608 = vmatpush2.msra.mxu0 0.0
    %1609 = vmatprep.subr.mxu0 0.0
    %1610 = vmatpush2.msra.mxu0 0.0
    %1611 = vmatprep.subr.mxu0 0.0
    %1612 = vmatpush2.msra.mxu0 0.0
    %1613 = vmatprep.subr.mxu0 0.0
    %1614 = vmatpush2.msra.mxu0 0.0
    %1615 = vmatprep.subr.mxu0 0.0
    %1616 = vmatpush2.msra.mxu0 0.0
    %1617 = vmatprep.subr.mxu0 0.0
    %1618 = vmatpush2.msra.mxu0 0.0
    %1619 = vmatprep.subr.mxu0 0.0
    %1620 = vmatpush2.msra.mxu0 0.0
    %1621 = vmatprep.subr.mxu0 0.0
    %1622 = vmatpush2.msra.mxu0 0.0
    %1623 = vmatprep.subr.mxu0 0.0
    %1624 = vmatpush2.msra.mxu0 0.0
    %1625 = vmatprep.subr.mxu0 0.0
    %1626 = vmatpush2.msra.mxu0 0.0
    %1627 = vmatprep.subr.mxu0 0.0
    %1628 = vmatpush2.msra.mxu0 0.0
    %1629 = vmatprep.subr.mxu0 0.0
    %1630 = vmatpush2.msra.mxu0 0.0
    %1631 = vmatprep.subr.mxu0 0.0
    %1632 = vmatpush2.msra.mxu0 0.0
    %1633 = vmatprep.mubr.f32.mxu0 0.0
    %1634 = vmatmul.mubr.f32.gmra.mxu0 %v1558
    %v1635 = vpop.f32.mrf.mxu0
    %v1636 = vadd.f32 %v1555, %v1635
    %v1637 = vpop.f32.mrf.mxu0
    %1638 = vmatprep.mubr.f32.mxu0 0.0
    %1639 = vmatmul.mubr.f32.gmra.mxu0 %v1561
    %v1640 = vpop.f32.mrf.mxu0
    %v1641 = vadd.f32 %v1555, %v1640
    %v1642 = vpop.f32.mrf.mxu0
    %1643 = vmatprep.mubr.f32.mxu0 0.0
    %1644 = vmatmul.mubr.f32.gmra.mxu0 %v1564
    %v1645 = vpop.f32.mrf.mxu0
    %v1646 = vadd.f32 %v1555, %v1645
    %v1647 = vpop.f32.mrf.mxu0
    %1648 = vmatprep.mubr.f32.mxu0 0.0
    %1649 = vmatmul.mubr.f32.gmra.mxu0 %v1567
    %v1650 = vpop.f32.mrf.mxu0
    %v1651 = vadd.f32 %v1555, %v1650
    %v1652 = vpop.f32.mrf.mxu0
    %1653 = vdwg.mxu0
    %v1654 = vmul.f32 %v1636, 1.442695
    %v1655 = vpow.pop %v1654
    %v1656 = vmul.f32 %v1641, 1.442695
    %v1657 = vpow.pop %v1656
    %v1658 = vmul.f32 %v1646, 1.442695
    %v1659 = vpow.pop %v1658
    %v1660 = vmul.f32 %v1651, 1.442695
    %v1661 = vpow.pop %v1660
    %v1662 = vsub.f32 0.0, %v1655
    %v1663 = vsub.f32 0.0, %v1657
    %v1664 = vsub.f32 0.0, %v1659
    %v1665 = vsub.f32 0.0, %v1661
    %1666 = vst [vmem:[%s10] sm:$0xff] %v1662
    %1667 = vst [vmem:[%s10 + $0x8] sm:$0xff] %v1663
    %1668 = vst [vmem:[%s10 + $0x10] sm:$0xff] %v1664
    %1669 = vst [vmem:[%s10 + $0x18] sm:$0xff] %v1665
    %v1670 = vld [vmem:[%s1] sm:$0xff]
    %v1671 = vld [vmem:[%s1 + $0x8] sm:$0xff]
    %v1672 = vld [vmem:[%s1 + $0x10] sm:$0xff]
    %v1673 = vld [vmem:[%s1 + $0x18] sm:$0xff]
    %v1674 = vadd.f32 %v1670, %v1662
    %v1675 = vadd.f32 %v1671, %v1663
    %v1676 = vadd.f32 %v1672, %v1664
    %v1677 = vadd.f32 %v1673, %v1665
    %1678 = vst [vmem:[%s9] sm:$0xff] %v1674
    %1679 = vst [vmem:[%s9 + $0x8] sm:$0xff] %v1675
    %1680 = vst [vmem:[%s9 + $0x10] sm:$0xff] %v1676
    %1681 = vst [vmem:[%s9 + $0x18] sm:$0xff] %v1677
    // Predicated region
    $region54: #{fwd.1} parent=1 // pred_check
      _
    $region55: #{fwd.1} parent=1 // pred_check_branch
      %1683 = sbr.rel (0) target = $region57
    $region56: #{fwd.1} parent=1 // pred_region
      _
    $region57: #{fwd.1} parent=1 // pred_fallthru
      _
    // Predicated region
    $region58: #{fwd.1} parent=1 // pred_check
      _
    $region59: #{fwd.1} parent=1 // pred_check_branch
      %1685 = sbr.rel (0) target = $region61
    $region60: #{fwd.1} parent=1 // pred_region
      _
    $region61: #{fwd.1} parent=1 // pred_fallthru
      _
    // Predicated region
    $region62: #{fwd.1} parent=1 // pred_check
      _
    $region63: #{fwd.1} parent=1 // pred_check_branch
      %1687 = sbr.rel (0) target = $region65
    $region64: #{fwd.1} parent=1 // pred_region
      %s1689 = ssub.s32 128, 128
      %1690 = vsyncadd [#allocation5], %s1689
      %s1691 = sshll.u32 [#allocation11], 4
      %s1692 = int_to_ptr.vmem [resolvable:$true] %s1691
      %1697 = dma.vmem_to_hbm [thread:$0]  %s1692, 128, %s11, [#allocation5], 64, 64, 4
    $region65: #{fwd.1} parent=1 // pred_fallthru
      _
    // Predicated region
    $region66: #{fwd.1} parent=1 // pred_check
      _
    $region67: #{fwd.1} parent=1 // pred_check_branch
      %1699 = sbr.rel (0) target = $region69
    $region68: #{fwd.1} parent=1 // pred_region
      %s1701 = ssub.s32 128, 128
      %1702 = vsyncadd [#allocation13], %s1701
      %s1703 = sshll.u32 [#allocation12], 4
      %s1704 = int_to_ptr.vmem [resolvable:$true] %s1703
      %1709 = dma.vmem_to_hbm [thread:$0]  %s1704, 128, %s12, [#allocation13], 64, 64, 4
    $region69: #{fwd.1} parent=1 // pred_fallthru
      _
    // Predicated region
    $region70: #{fwd.1} parent=1 // pred_check
      _
    $region71: #{fwd.1} parent=1 // pred_check_branch
      %1711 = sbr.rel (0) target = $region73
    $region72: #{fwd.1} parent=1 // pred_region
      _
    $region73: #{fwd.1} parent=1 // pred_fallthru
      _
    // Predicated region
    $region74: #{fwd.1} parent=1 // pred_check
      _
    $region75: #{fwd.1} parent=1 // pred_check_branch
      %1713 = sbr.rel (0) target = $region77
    $region76: #{fwd.1} parent=1 // pred_region
      _
    $region77: #{fwd.1} parent=1 // pred_fallthru
      _
    // Predicated region
    $region78: #{fwd.1} parent=1 // pred_check
      _
    $region79: #{fwd.1} parent=1 // pred_check_branch
      %1715 = sbr.rel (0) target = $region81
    $region80: #{fwd.1} parent=1 // pred_region
      %1716 = dma.done [#allocation5], 128
    $region81: #{fwd.1} parent=1 // pred_fallthru
      _
    // Predicated region
    $region82: #{fwd.1} parent=1 // pred_check
      _
    $region83: #{fwd.1} parent=1 // pred_check_branch
      %1718 = sbr.rel (0) target = $region85
    $region84: #{fwd.1} parent=1 // pred_region
      %1719 = dma.done [#allocation13], 128
    $region85: #{fwd.1} parent=1 // pred_fallthru
      _
    %1720 = vsyncpa [#allocation4], 1
    %1721 = vsyncpa [#allocation7], 1
    %1722 = vsyncpa [#allocation10], 1
    %1723 = vsyncpa [#allocation5], 1
    %1724 = vsyncpa [#allocation13], 1

</llo_original>
